<compile_context>
chip_gen: v7x
topology: tpu7x:2x2x1
jax: 0.10.0
libtpu: 0.0.40
codegen_flags: <defaults>
</compile_context>

<pallas_src>
import functools

import jax
import jax.numpy as jnp
from jax.experimental import pallas as pl
from jax.experimental.pallas import tpu as pltpu


# ----------------------------------------------------------------------------
# Fused kernel: Bb batch elements per grid step
# ----------------------------------------------------------------------------
def gat_fused_kernel(x_ref, coord_ref, w_a_ref, se1_w2t_ref, w_b_ref,
                     se2_w2t_ref, o_ref, *, alpha, cutoff2, nheads, nhid, nout):
    bb, N, nfeat = x_ref.shape
    c2 = nheads * nhid
    mm_dtype = w_a_ref.dtype          # bf16 on v6e/v7x if requested, else f32

    x = x_ref[...].astype(jnp.float32)        # (bb, N, nfeat)
    coord = coord_ref[...].astype(jnp.float32)  # (bb, N, 3)

    # ---- adjacency bias from squared pairwise distances (no sqrt, pure VPU) -----
    d2 = jnp.zeros((bb, N, N), jnp.float32)
    for k in range(3):                                       # 3 coords, static unroll
        ck = coord[..., k:k + 1]                             # (bb, N, 1)
        dk = ck - jnp.swapaxes(ck, 1, 2)                     # (bb, N, N)
        d2 = d2 + dk * dk
    mask_bias = jnp.where(d2 < cutoff2, 0.0, -9e15)          # built once, reused

    def se_scale(v, w1t, w2t):
        # Squeeze-and-Excitation: pool over nodes -> fc1 -> ReLU -> fc2 -> sigmoid gate.
        y = jnp.mean(v, axis=1)                                              # (bb, C)
        y = jnp.maximum(jnp.dot(y, w1t, preferred_element_type=jnp.float32), 0.0)
        y = jax.nn.sigmoid(jnp.dot(y, w2t, preferred_element_type=jnp.float32))
        return v * y[:, None, :]

    def softmax_rows(e_raw, bias):
        # LeakyReLU + additive mask + numerically-stable softmax over the last axis.
        e = jnp.where(e_raw > 0.0, e_raw, alpha * e_raw) + bias
        e = e - jnp.max(e, axis=-1, keepdims=True)
        p = jnp.exp(e)
        d = jnp.sum(p, axis=-1, keepdims=True)
        r = pl.reciprocal(d, approx=True)
        r = r * (2.0 - d * r)          # one Newton step -> ~f32 accuracy, EUP not VPU divide
        return p * r

    def elu(v):
        return jnp.where(v > 0.0, v, jnp.exp(v) - 1.0)

    # ---- SE1 ---------------------------------------------------------------------
    proj_cols = c2 + 2 * nheads
    w_heads = w_a_ref[:, :proj_cols].astype(mm_dtype)
    w_se1_fc1 = w_a_ref[:, proj_cols:].astype(jnp.float32)
    x1 = se_scale(x, w_se1_fc1, se1_w2t_ref[...].astype(jnp.float32))

    # ---- all heads: ONE stacked lane-dense MXU matmul over bb*N rows --------------
    #   x1 @ [W_0 | ... | W_{H-1} | W_h a1_h | W_h a2_h]
    hall = jnp.dot(x1.reshape(bb * N, nfeat).astype(mm_dtype), w_heads,
                   preferred_element_type=jnp.float32).reshape(bb, N, proj_cols)
    h_feat = hall[..., :c2]                                         # (bb, N, H*nhid)
    f1 = jnp.swapaxes(hall[..., c2:c2 + nheads], 1, 2)              # (bb, H, N)
    f2 = jnp.swapaxes(hall[..., c2 + nheads:], 1, 2)                # (bb, H, N)

    # scores + softmax for ALL heads at once
    e = f1[..., :, None] + f2[..., None, :]                         # (bb, H, N, N)
    p = softmax_rows(e, mask_bias[:, None, :, :])                   # (bb, H, N, N)

    # per-head weighted sums (H is a tiny static constant; each op is Bb-batched)
    head_outs = []
    for hd in range(nheads):
        ph = p[:, hd].astype(mm_dtype)                              # (bb, N, N)
        hh = h_feat[..., hd * nhid:(hd + 1) * nhid].astype(mm_dtype)  # (bb, N, nhid)
        head_outs.append(elu(jnp.einsum('bnm,bmf->bnf', ph, hh,
                                        preferred_element_type=jnp.float32)))
    x2 = jnp.concatenate(head_outs, axis=-1)                        # (bb, N, c2)

    # ---- SE2 -----------------------------------------------------------------------
    w_out = w_b_ref[:, :nout + 2].astype(mm_dtype)
    w_se2_fc1 = w_b_ref[:, nout + 2:].astype(jnp.float32)
    x3 = se_scale(x2, w_se2_fc1, se2_w2t_ref[...].astype(jnp.float32))

    # ---- output attention (concat=False: no internal ELU), then final F.elu ---------
    hout = jnp.dot(x3.reshape(bb * N, c2).astype(mm_dtype), w_out,
                   preferred_element_type=jnp.float32).reshape(bb, N, nout + 2)
    h_o = hout[..., :nout]                                          # (bb, N, nout)
    e_o = hout[..., nout:nout + 1] + jnp.swapaxes(hout[..., nout + 1:nout + 2], 1, 2)
    p_o = softmax_rows(e_o, mask_bias)                              # (bb, N, N)
    out = jnp.einsum('bnm,bmf->bnf', p_o.astype(mm_dtype), h_o.astype(mm_dtype),
                     preferred_element_type=jnp.float32)
    o_ref[...] = elu(out).astype(o_ref.dtype)


# ----------------------------------------------------------------------------
# Wrapper: block-batch choice, weight folding (call once), pallas_call plumbing
# ----------------------------------------------------------------------------
def _pick_block_batch(B, N, target_rows=256, max_rows=2048):
    """Pick how many batch elements each grid step processes.

    Want bb*N >= target_rows (fill the 256-wide MXU on v6e/v7x, amortize the
    ~0.35us per-step overhead), bb*N <= max_rows (keep the (bb, H, N, N) f32
    score tensors well inside VMEM - v7x only has 64 MiB), and >= 2 grid steps
    when B allows so both v7x TensorCores get work under ("parallel",).
    """
    divisors = [d for d in range(1, B + 1) if B % d == 0]
    cands = [d for d in divisors if d < B] or divisors      # keep >=2 steps if possible
    cands = [d for d in cands if d * N <= max_rows] or [1]
    for d in cands:                                          # ascending
        if d * N >= target_rows:
            return d
    return cands[-1]


def fold_gat_params(params, mxu_dtype=jnp.float32):
    """Fold attention vectors into the projections and merge small weight slabs.

    Call ONCE outside the per-step path (it is a handful of tiny XLA ops).
    Use mxu_dtype=jnp.bfloat16 on v6e/v7x for 2x MXU throughput; the kernel keeps
    elementwise/exp/reciprocal math in f32 (v5e-safe) and accumulates matmuls in f32.
    """
    nheads = len(params["att_W"])
    nhid = params["att_W"][0].shape[1]
    nout = params["out_W"].shape[1]

    # (x W) a == x (W a): fold both halves of every attention vector into the matmul.
    W_all = jnp.concatenate(params["att_W"], axis=1)                     # (nfeat, H*nhid)
    c1 = jnp.concatenate([W @ a[:nhid] for W, a in zip(params["att_W"], params["att_a"])],
                         axis=1)                                         # (nfeat, H)
    c2 = jnp.concatenate([W @ a[nhid:] for W, a in zip(params["att_W"], params["att_a"])],
                         axis=1)                                         # (nfeat, H)
    Wout, aout = params["out_W"], params["out_a"]

    # One lane-dense slab per row count: fewer DMA descriptors, less (8,128) padding.
    w_a = jnp.concatenate([W_all, c1, c2, params["se1_fc1"].T], axis=1).astype(mxu_dtype)
    w_b = jnp.concatenate([Wout, Wout @ aout[:nout], Wout @ aout[nout:],
                           params["se2_fc1"].T], axis=1).astype(mxu_dtype)
    return {
        "w_a": w_a,                                              # (nfeat, H*nhid+2H + nfeat//4)
        "se1_w2t": params["se1_fc2"].T.astype(jnp.float32),      # (nfeat//4, nfeat)
        "w_b": w_b,                                              # (H*nhid, nout+2 + H*nhid//4)
        "se2_w2t": params["se2_fc2"].T.astype(jnp.float32),      # (H*nhid//4, H*nhid)
        "nheads": nheads, "nhid": nhid, "nout": nout,
    }


def gat_forward(folded, x, coord, *, alpha, cut_off):
    B, N, nfeat = x.shape
    nheads, nhid, nout = folded["nheads"], folded["nhid"], folded["nout"]
    c2 = nheads * nhid
    w_a, se1_w2t = folded["w_a"], folded["se1_w2t"]
    w_b, se2_w2t = folded["w_b"], folded["se2_w2t"]

    bb = _pick_block_batch(B, N)
    grid = (B // bb,)

    kern = functools.partial(gat_fused_kernel, alpha=alpha, cutoff2=cut_off * cut_off,
                             nheads=nheads, nhid=nhid, nout=nout)

    weights_bytes = sum(int(a.size) * a.dtype.itemsize
                        for a in (w_a, se1_w2t, w_b, se2_w2t))
    flops = 2 * B * (3 * N * N
                     + N * nfeat * (c2 + 2 * nheads)
                     + nheads * N * N * nhid
                     + N * c2 * (nout + 2)
                     + N * N * nout)
    cost = pl.CostEstimate(
        flops=int(flops),
        transcendentals=int(B * (nheads + 1) * N * N + 2 * B * (nfeat + c2)),
        bytes_accessed=int(x.size * x.dtype.itemsize
                           + coord.size * coord.dtype.itemsize
                           + B * N * nout * x.dtype.itemsize
                           + (B // bb) * weights_bytes))

    return pl.pallas_call(
        kern,
        out_shape=jax.ShapeDtypeStruct((B, N, nout), x.dtype),
        grid=grid,
        in_specs=[
            pl.BlockSpec((bb, N, nfeat), lambda b: (b, 0, 0)),
            pl.BlockSpec((bb, N, 3), lambda b: (b, 0, 0)),
            pl.BlockSpec(w_a.shape, lambda b: (0, 0)),
            pl.BlockSpec(se1_w2t.shape, lambda b: (0, 0)),
            pl.BlockSpec(w_b.shape, lambda b: (0, 0)),
            pl.BlockSpec(se2_w2t.shape, lambda b: (0, 0)),
        ],
        out_specs=pl.BlockSpec((bb, N, nout), lambda b: (b, 0, 0)),
        compiler_params=pltpu.CompilerParams(
            dimension_semantics=("parallel",),
            vmem_limit_bytes=32 * 1024 * 1024),
        cost_estimate=cost,
    )(x, coord, w_a, se1_w2t, w_b, se2_w2t)


# ----------------------------------------------------------------------------
# Pure-JAX reference (same math, exact division) for correctness checking
# ----------------------------------------------------------------------------
def _elu(v):
    return jnp.where(v > 0, v, jnp.exp(v) - 1.0)


def gat_forward_ref(params, x, coord, *, alpha, cut_off):
    diff = coord[:, :, None, :] - coord[:, None, :, :]
    dist2 = jnp.sum(diff * diff, axis=-1)
    bias = jnp.where(dist2 < cut_off * cut_off, 0.0, -9e15)

    def se(v, w1, w2):
        y = jnp.mean(v, axis=1)
        y = jax.nn.sigmoid(jnp.maximum(y @ w1.T, 0.0) @ w2.T)
        return v * y[:, None, :]

    def attn(h, a, apply_elu):
        fo = h.shape[-1]
        f1 = h @ a[:fo]
        f2 = h @ a[fo:]
        e = f1 + jnp.swapaxes(f2, 1, 2)
        e = jnp.where(e > 0, e, alpha * e) + bias
        p = jax.nn.softmax(e, axis=-1)
        out = jnp.einsum('bnm,bmf->bnf', p, h)
        return _elu(out) if apply_elu else out

    x1 = se(x, params["se1_fc1"], params["se1_fc2"])
    heads = [attn(x1 @ W, a, True) for W, a in zip(params["att_W"], params["att_a"])]
    x2 = jnp.concatenate(heads, axis=-1)
    x3 = se(x2, params["se2_fc1"], params["se2_fc2"])
    out = attn(x3 @ params["out_W"], params["out_a"], False)
    return _elu(out)


# ----------------------------------------------------------------------------
# Parameter container
# ----------------------------------------------------------------------------
def init_gat_params(key, nfeat, nhid, nout, nheads):
    ks = jax.random.split(key, 6 + 2 * nheads)
    p = {}
    p["se1_fc1"] = 0.1 * jax.random.normal(ks[0], (nfeat // 4, nfeat), jnp.float32)
    p["se1_fc2"] = 0.1 * jax.random.normal(ks[1], (nfeat, nfeat // 4), jnp.float32)
    p["att_W"], p["att_a"] = [], []
    for h in range(nheads):
        p["att_W"].append(0.1 * jax.random.normal(ks[2 + 2 * h], (nfeat, nhid), jnp.float32))
        p["att_a"].append(0.1 * jax.random.normal(ks[3 + 2 * h], (2 * nhid, 1), jnp.float32))
    c2 = nhid * nheads
    p["se2_fc1"] = 0.1 * jax.random.normal(ks[2 + 2 * nheads], (c2 // 4, c2), jnp.float32)
    p["se2_fc2"] = 0.1 * jax.random.normal(ks[3 + 2 * nheads], (c2, c2 // 4), jnp.float32)
    p["out_W"] = 0.1 * jax.random.normal(ks[4 + 2 * nheads], (c2, nout), jnp.float32)
    p["out_a"] = 0.1 * jax.random.normal(ks[5 + 2 * nheads], (2 * nout, 1), jnp.float32)
    return p


if __name__ == "__main__":
    B, N = 2, 16
    nfeat, nhid, nout, nheads = 16, 8, 8, 2
    alpha, cut_off = 0.2, 1.5

    key = jax.random.PRNGKey(0)
    k_x, k_c, k_p = jax.random.split(key, 3)
    x = jax.random.normal(k_x, (B, N, nfeat), jnp.float32)
    coord = jax.random.normal(k_c, (B, N, 3), jnp.float32)
    params = init_gat_params(k_p, nfeat, nhid, nout, nheads)

    # Fold weights ONCE (outside the per-call path).  Pass mxu_dtype=jnp.bfloat16 here
    # for extra MXU throughput on v6e/v7x; demo keeps f32 for a tight numerical check.
    folded = fold_gat_params(params, mxu_dtype=jnp.float32)

    out = gat_forward(folded, x, coord, alpha=alpha, cut_off=cut_off)
    out = jax.block_until_ready(out)
    ref = gat_forward_ref(params, x, coord, alpha=alpha, cut_off=cut_off)

    assert out.shape == (B, N, nout), out.shape
    assert bool(jnp.all(jnp.isfinite(out)))
    assert bool(jnp.allclose(out, ref, atol=1e-3, rtol=1e-3)), \
        float(jnp.max(jnp.abs(out - ref)))
    print("KERNEL_OK")
</pallas_src>

<mosaic_0001>
module attributes {stable_mosaic.version = 11 : i64} {
  func.func @gat_fused_kernel(%arg0: i32, %arg1: memref<1x16x16xf32, #tpu.memory_space<vmem>>, %arg2: memref<1x16x3xf32, #tpu.memory_space<vmem>>, %arg3: memref<16x24xf32, #tpu.memory_space<vmem>>, %arg4: memref<4x16xf32, #tpu.memory_space<vmem>>, %arg5: memref<16x14xf32, #tpu.memory_space<vmem>>, %arg6: memref<4x16xf32, #tpu.memory_space<vmem>>, %arg7: memref<1x16x8xf32, #tpu.memory_space<vmem>>) attributes {dimension_semantics = [#tpu.dimension_semantics<parallel>], iteration_bounds = array<i64: 2>, scalar_prefetch = 0 : i64, scratch_operands = 0 : i64, tpu.core_type = #tpu.core_type<tc>, window_params = [{transform_indices = @transform_0, window_bounds = array<i64: 1, 16, 16>}, {transform_indices = @transform_1, window_bounds = array<i64: 1, 16, 3>}, {pipeline_mode = #tpu.pipeline_mode<synchronous>, transform_indices = @transform_2, window_bounds = array<i64: 16, 24>}, {pipeline_mode = #tpu.pipeline_mode<synchronous>, transform_indices = @transform_3, window_bounds = array<i64: 4, 16>}, {pipeline_mode = #tpu.pipeline_mode<synchronous>, transform_indices = @transform_4, window_bounds = array<i64: 16, 14>}, {pipeline_mode = #tpu.pipeline_mode<synchronous>, transform_indices = @transform_5, window_bounds = array<i64: 4, 16>}, {transform_indices = @transform_6, window_bounds = array<i64: 1, 16, 8>}]} {
    %c0 = arith.constant 0 : index
    %c0_0 = arith.constant 0 : index
    %c0_1 = arith.constant 0 : index
    %0 = vector.load %arg1[%c0, %c0_0, %c0_1] : memref<1x16x16xf32, #tpu.memory_space<vmem>>, vector<1x16x16xf32>
    %c0_2 = arith.constant 0 : index
    %c0_3 = arith.constant 0 : index
    %c0_4 = arith.constant 0 : index
    %1 = vector.load %arg2[%c0_2, %c0_3, %c0_4] : memref<1x16x3xf32, #tpu.memory_space<vmem>>, vector<1x16x3xf32>
    %cst = arith.constant 0.000000e+00 : f32
    %2 = vector.broadcast %cst : f32 to vector<1x16x16xf32>
    %3 = vector.extract_strided_slice %1 {offsets = [0, 0, 0], sizes = [1, 16, 1], strides = [1, 1, 1]} : vector<1x16x3xf32> to vector<1x16x1xf32>
    %4 = tpu.transpose %3, [0, 2, 1] : vector<1x16x1xf32> -> vector<1x1x16xf32>
    %5 = vector.broadcast %3 : vector<1x16x1xf32> to vector<1x16x16xf32>
    %6 = vector.broadcast %4 : vector<1x1x16xf32> to vector<1x16x16xf32>
    %7 = arith.subf %5, %6 : vector<1x16x16xf32>
    %8 = arith.mulf %7, %7 : vector<1x16x16xf32>
    %9 = arith.addf %2, %8 : vector<1x16x16xf32>
    %10 = vector.extract_strided_slice %1 {offsets = [0, 0, 1], sizes = [1, 16, 1], strides = [1, 1, 1]} : vector<1x16x3xf32> to vector<1x16x1xf32>
    %11 = tpu.transpose %10, [0, 2, 1] : vector<1x16x1xf32> -> vector<1x1x16xf32>
    %12 = vector.broadcast %10 : vector<1x16x1xf32> to vector<1x16x16xf32>
    %13 = vector.broadcast %11 : vector<1x1x16xf32> to vector<1x16x16xf32>
    %14 = arith.subf %12, %13 : vector<1x16x16xf32>
    %15 = arith.mulf %14, %14 : vector<1x16x16xf32>
    %16 = arith.addf %9, %15 : vector<1x16x16xf32>
    %17 = vector.extract_strided_slice %1 {offsets = [0, 0, 2], sizes = [1, 16, 1], strides = [1, 1, 1]} : vector<1x16x3xf32> to vector<1x16x1xf32>
    %18 = tpu.transpose %17, [0, 2, 1] : vector<1x16x1xf32> -> vector<1x1x16xf32>
    %19 = vector.broadcast %17 : vector<1x16x1xf32> to vector<1x16x16xf32>
    %20 = vector.broadcast %18 : vector<1x1x16xf32> to vector<1x16x16xf32>
    %21 = arith.subf %19, %20 : vector<1x16x16xf32>
    %22 = arith.mulf %21, %21 : vector<1x16x16xf32>
    %23 = arith.addf %16, %22 : vector<1x16x16xf32>
    %cst_5 = arith.constant 2.250000e+00 : f32
    %24 = vector.broadcast %cst_5 : f32 to vector<1x16x16xf32>
    %25 = arith.cmpf olt, %23, %24 : vector<1x16x16xf32>
    %cst_6 = arith.constant 0.000000e+00 : f32
    %cst_7 = arith.constant -9.000000e+15 : f32
    %26 = vector.broadcast %cst_6 : f32 to vector<1x16x16xf32>
    %27 = vector.broadcast %cst_7 : f32 to vector<1x16x16xf32>
    %28 = arith.select %25, %26, %27 : vector<1x16x16xi1>, vector<1x16x16xf32>
    %c0_8 = arith.constant 0 : index
    %c0_9 = arith.constant 0 : index
    %29 = vector.load %arg3[%c0_8, %c0_9] : memref<16x24xf32, #tpu.memory_space<vmem>>, vector<16x20xf32>
    %c0_10 = arith.constant 0 : index
    %c20 = arith.constant 20 : index
    %30 = vector.load %arg3[%c0_10, %c20] : memref<16x24xf32, #tpu.memory_space<vmem>>, vector<16x4xf32>
    %c0_11 = arith.constant 0 : index
    %c0_12 = arith.constant 0 : index
    %31 = vector.load %arg4[%c0_11, %c0_12] : memref<4x16xf32, #tpu.memory_space<vmem>>, vector<4x16xf32>
    %cst_13 = arith.constant dense<0.000000e+00> : vector<1x16xf32>
    %32 = vector.multi_reduction <add>, %0, %cst_13 [1] : vector<1x16x16xf32> to vector<1x16xf32>
    %cst_14 = arith.constant 1.600000e+01 : f32
    %33 = vector.broadcast %cst_14 : f32 to vector<1x16xf32>
    %34 = arith.divf %32, %33 : vector<1x16xf32>
    %cst_15 = arith.constant dense<0.000000e+00> : vector<1x4xf32>
    %35 = tpu.matmul %34, %30, %cst_15 {dimension_numbers = #tpu.dot_dimension_numbers<[1], [0], [0], [1], [0, 0, 1, 1], [], []>} : vector<1x16xf32>, vector<16x4xf32>, vector<1x4xf32> -> vector<1x4xf32>
    %cst_16 = arith.constant 0.000000e+00 : f32
    %36 = vector.broadcast %cst_16 : f32 to vector<1x4xf32>
    %37 = arith.maximumf %35, %36 : vector<1x4xf32>
    %cst_17 = arith.constant dense<0.000000e+00> : vector<1x16xf32>
    %38 = tpu.matmul %37, %31, %cst_17 {dimension_numbers = #tpu.dot_dimension_numbers<[1], [0], [0], [1], [0, 0, 1, 1], [], []>} : vector<1x4xf32>, vector<4x16xf32>, vector<1x16xf32> -> vector<1x16xf32>
    %39 = arith.negf %38 : vector<1x16xf32>
    %40 = math.exp %39 : vector<1x16xf32>
    %cst_18 = arith.constant 1.000000e+00 : f32
    %41 = vector.broadcast %cst_18 : f32 to vector<1x16xf32>
    %42 = arith.addf %41, %40 : vector<1x16xf32>
    %43 = arith.divf %41, %42 : vector<1x16xf32>
    %44 = vector.shape_cast %43 : vector<1x16xf32> to vector<1x1x16xf32>
    %45 = vector.broadcast %44 : vector<1x1x16xf32> to vector<1x16x16xf32>
    %46 = arith.mulf %0, %45 : vector<1x16x16xf32>
    %47 = vector.shape_cast %46 : vector<1x16x16xf32> to vector<16x16xf32>
    %cst_19 = arith.constant dense<0.000000e+00> : vector<16x20xf32>
    %48 = tpu.matmul %47, %29, %cst_19 {dimension_numbers = #tpu.dot_dimension_numbers<[1], [0], [0], [1], [0, 0, 1, 1], [], []>} : vector<16x16xf32>, vector<16x20xf32>, vector<16x20xf32> -> vector<16x20xf32>
    %49 = vector.shape_cast %48 : vector<16x20xf32> to vector<1x16x20xf32>
    %50 = vector.extract_strided_slice %49 {offsets = [0, 0, 0], sizes = [1, 16, 16], strides = [1, 1, 1]} : vector<1x16x20xf32> to vector<1x16x16xf32>
    %51 = vector.extract_strided_slice %49 {offsets = [0, 0, 16], sizes = [1, 16, 2], strides = [1, 1, 1]} : vector<1x16x20xf32> to vector<1x16x2xf32>
    %52 = tpu.transpose %51, [0, 2, 1] : vector<1x16x2xf32> -> vector<1x2x16xf32>
    %53 = vector.extract_strided_slice %49 {offsets = [0, 0, 18], sizes = [1, 16, 2], strides = [1, 1, 1]} : vector<1x16x20xf32> to vector<1x16x2xf32>
    %54 = tpu.transpose %53, [0, 2, 1] : vector<1x16x2xf32> -> vector<1x2x16xf32>
    %55 = vector.shape_cast %52 : vector<1x2x16xf32> to vector<1x2x16x1xf32>
    %56 = vector.shape_cast %54 : vector<1x2x16xf32> to vector<1x2x1x16xf32>
    %57 = vector.broadcast %55 : vector<1x2x16x1xf32> to vector<1x2x16x16xf32>
    %58 = vector.broadcast %56 : vector<1x2x1x16xf32> to vector<1x2x16x16xf32>
    %59 = arith.addf %57, %58 : vector<1x2x16x16xf32>
    %60 = vector.shape_cast %28 : vector<1x16x16xf32> to vector<1x1x16x16xf32>
    %cst_20 = arith.constant 0.000000e+00 : f32
    %61 = vector.broadcast %cst_20 : f32 to vector<1x2x16x16xf32>
    %62 = arith.cmpf ogt, %59, %61 : vector<1x2x16x16xf32>
    %cst_21 = arith.constant 2.000000e-01 : f32
    %63 = vector.broadcast %cst_21 : f32 to vector<1x2x16x16xf32>
    %64 = arith.mulf %63, %59 : vector<1x2x16x16xf32>
    %65 = arith.select %62, %59, %64 : vector<1x2x16x16xi1>, vector<1x2x16x16xf32>
    %66 = vector.broadcast %60 : vector<1x1x16x16xf32> to vector<1x2x16x16xf32>
    %67 = arith.addf %65, %66 : vector<1x2x16x16xf32>
    %cst_22 = arith.constant dense<0xFF800000> : vector<1x2x16xf32>
    %68 = vector.multi_reduction <maximumf>, %67, %cst_22 [3] : vector<1x2x16x16xf32> to vector<1x2x16xf32>
    %69 = vector.shape_cast %68 : vector<1x2x16xf32> to vector<1x2x16x1xf32>
    %70 = vector.broadcast %69 : vector<1x2x16x1xf32> to vector<1x2x16x16xf32>
    %71 = arith.subf %67, %70 : vector<1x2x16x16xf32>
    %72 = math.exp %71 : vector<1x2x16x16xf32>
    %cst_23 = arith.constant dense<0.000000e+00> : vector<1x2x16xf32>
    %73 = vector.multi_reduction <add>, %72, %cst_23 [3] : vector<1x2x16x16xf32> to vector<1x2x16xf32>
    %74 = vector.shape_cast %73 : vector<1x2x16xf32> to vector<1x2x16x1xf32>
    %75 = tpu.reciprocal %74 {approx = true} : vector<1x2x16x1xf32> -> vector<1x2x16x1xf32>
    %76 = arith.mulf %74, %75 : vector<1x2x16x1xf32>
    %cst_24 = arith.constant 2.000000e+00 : f32
    %77 = vector.broadcast %cst_24 : f32 to vector<1x2x16x1xf32>
    %78 = arith.subf %77, %76 : vector<1x2x16x1xf32>
    %79 = arith.mulf %75, %78 : vector<1x2x16x1xf32>
    %80 = vector.broadcast %79 : vector<1x2x16x1xf32> to vector<1x2x16x16xf32>
    %81 = arith.mulf %72, %80 : vector<1x2x16x16xf32>
    %82 = vector.extract_strided_slice %81 {offsets = [0, 0, 0, 0], sizes = [1, 1, 16, 16], strides = [1, 1, 1, 1]} : vector<1x2x16x16xf32> to vector<1x1x16x16xf32>
    %83 = vector.shape_cast %82 : vector<1x1x16x16xf32> to vector<1x16x16xf32>
    %84 = vector.extract_strided_slice %50 {offsets = [0, 0, 0], sizes = [1, 16, 8], strides = [1, 1, 1]} : vector<1x16x16xf32> to vector<1x16x8xf32>
    "tpu.trace_start"() <{level = 10 : i32, message = "bnm,bmf->bnf"}> : () -> ()
    %cst_25 = arith.constant dense<0.000000e+00> : vector<1x16x8xf32>
    %85 = tpu.matmul %83, %84, %cst_25 {dimension_numbers = #tpu.dot_dimension_numbers<[2], [1], [1], [2], [0, 0, 0, 1, 1, 2], [0], [0]>} : vector<1x16x16xf32>, vector<1x16x8xf32>, vector<1x16x8xf32> -> vector<1x16x8xf32>
    %cst_26 = arith.constant 0.000000e+00 : f32
    "tpu.trace_stop"() : () -> ()
    %86 = vector.broadcast %cst_26 : f32 to vector<1x16x8xf32>
    %87 = arith.cmpf ogt, %85, %86 : vector<1x16x8xf32>
    %88 = math.exp %85 : vector<1x16x8xf32>
    %cst_27 = arith.constant 1.000000e+00 : f32
    %89 = vector.broadcast %cst_27 : f32 to vector<1x16x8xf32>
    %90 = arith.subf %88, %89 : vector<1x16x8xf32>
    %91 = arith.select %87, %85, %90 : vector<1x16x8xi1>, vector<1x16x8xf32>
    %92 = vector.extract_strided_slice %81 {offsets = [0, 1, 0, 0], sizes = [1, 1, 16, 16], strides = [1, 1, 1, 1]} : vector<1x2x16x16xf32> to vector<1x1x16x16xf32>
    %93 = vector.shape_cast %92 : vector<1x1x16x16xf32> to vector<1x16x16xf32>
    %94 = vector.extract_strided_slice %50 {offsets = [0, 0, 8], sizes = [1, 16, 8], strides = [1, 1, 1]} : vector<1x16x16xf32> to vector<1x16x8xf32>
    "tpu.trace_start"() <{level = 10 : i32, message = "bnm,bmf->bnf"}> : () -> ()
    %cst_28 = arith.constant dense<0.000000e+00> : vector<1x16x8xf32>
    %95 = tpu.matmul %93, %94, %cst_28 {dimension_numbers = #tpu.dot_dimension_numbers<[2], [1], [1], [2], [0, 0, 0, 1, 1, 2], [0], [0]>} : vector<1x16x16xf32>, vector<1x16x8xf32>, vector<1x16x8xf32> -> vector<1x16x8xf32>
    %cst_29 = arith.constant 0.000000e+00 : f32
    "tpu.trace_stop"() : () -> ()
    %96 = vector.broadcast %cst_29 : f32 to vector<1x16x8xf32>
    %97 = arith.cmpf ogt, %95, %96 : vector<1x16x8xf32>
    %98 = math.exp %95 : vector<1x16x8xf32>
    %cst_30 = arith.constant 1.000000e+00 : f32
    %99 = vector.broadcast %cst_30 : f32 to vector<1x16x8xf32>
    %100 = arith.subf %98, %99 : vector<1x16x8xf32>
    %101 = arith.select %97, %95, %100 : vector<1x16x8xi1>, vector<1x16x8xf32>
    %102 = tpu.concatenate %91, %101 in 2 : vector<1x16x8xf32>, vector<1x16x8xf32> -> vector<1x16x16xf32>
    %c0_31 = arith.constant 0 : index
    %c0_32 = arith.constant 0 : index
    %103 = vector.load %arg5[%c0_31, %c0_32] : memref<16x14xf32, #tpu.memory_space<vmem>>, vector<16x10xf32>
    %c0_33 = arith.constant 0 : index
    %c10 = arith.constant 10 : index
    %104 = vector.load %arg5[%c0_33, %c10] : memref<16x14xf32, #tpu.memory_space<vmem>>, vector<16x4xf32>
    %c0_34 = arith.constant 0 : index
    %c0_35 = arith.constant 0 : index
    %105 = vector.load %arg6[%c0_34, %c0_35] : memref<4x16xf32, #tpu.memory_space<vmem>>, vector<4x16xf32>
    %cst_36 = arith.constant dense<0.000000e+00> : vector<1x16xf32>
    %106 = vector.multi_reduction <add>, %102, %cst_36 [1] : vector<1x16x16xf32> to vector<1x16xf32>
    %cst_37 = arith.constant 1.600000e+01 : f32
    %107 = vector.broadcast %cst_37 : f32 to vector<1x16xf32>
    %108 = arith.divf %106, %107 : vector<1x16xf32>
    %cst_38 = arith.constant dense<0.000000e+00> : vector<1x4xf32>
    %109 = tpu.matmul %108, %104, %cst_38 {dimension_numbers = #tpu.dot_dimension_numbers<[1], [0], [0], [1], [0, 0, 1, 1], [], []>} : vector<1x16xf32>, vector<16x4xf32>, vector<1x4xf32> -> vector<1x4xf32>
    %cst_39 = arith.constant 0.000000e+00 : f32
    %110 = vector.broadcast %cst_39 : f32 to vector<1x4xf32>
    %111 = arith.maximumf %109, %110 : vector<1x4xf32>
    %cst_40 = arith.constant dense<0.000000e+00> : vector<1x16xf32>
    %112 = tpu.matmul %111, %105, %cst_40 {dimension_numbers = #tpu.dot_dimension_numbers<[1], [0], [0], [1], [0, 0, 1, 1], [], []>} : vector<1x4xf32>, vector<4x16xf32>, vector<1x16xf32> -> vector<1x16xf32>
    %113 = arith.negf %112 : vector<1x16xf32>
    %114 = math.exp %113 : vector<1x16xf32>
    %cst_41 = arith.constant 1.000000e+00 : f32
    %115 = vector.broadcast %cst_41 : f32 to vector<1x16xf32>
    %116 = arith.addf %115, %114 : vector<1x16xf32>
    %117 = arith.divf %115, %116 : vector<1x16xf32>
    %118 = vector.shape_cast %117 : vector<1x16xf32> to vector<1x1x16xf32>
    %119 = vector.broadcast %118 : vector<1x1x16xf32> to vector<1x16x16xf32>
    %120 = arith.mulf %102, %119 : vector<1x16x16xf32>
    %121 = vector.shape_cast %120 : vector<1x16x16xf32> to vector<16x16xf32>
    %cst_42 = arith.constant dense<0.000000e+00> : vector<16x10xf32>
    %122 = tpu.matmul %121, %103, %cst_42 {dimension_numbers = #tpu.dot_dimension_numbers<[1], [0], [0], [1], [0, 0, 1, 1], [], []>} : vector<16x16xf32>, vector<16x10xf32>, vector<16x10xf32> -> vector<16x10xf32>
    %123 = vector.shape_cast %122 : vector<16x10xf32> to vector<1x16x10xf32>
    %124 = vector.extract_strided_slice %123 {offsets = [0, 0, 0], sizes = [1, 16, 8], strides = [1, 1, 1]} : vector<1x16x10xf32> to vector<1x16x8xf32>
    %125 = vector.extract_strided_slice %123 {offsets = [0, 0, 8], sizes = [1, 16, 1], strides = [1, 1, 1]} : vector<1x16x10xf32> to vector<1x16x1xf32>
    %126 = vector.extract_strided_slice %123 {offsets = [0, 0, 9], sizes = [1, 16, 1], strides = [1, 1, 1]} : vector<1x16x10xf32> to vector<1x16x1xf32>
    %127 = tpu.transpose %126, [0, 2, 1] : vector<1x16x1xf32> -> vector<1x1x16xf32>
    %128 = vector.broadcast %125 : vector<1x16x1xf32> to vector<1x16x16xf32>
    %129 = vector.broadcast %127 : vector<1x1x16xf32> to vector<1x16x16xf32>
    %130 = arith.addf %128, %129 : vector<1x16x16xf32>
    %cst_43 = arith.constant 0.000000e+00 : f32
    %131 = vector.broadcast %cst_43 : f32 to vector<1x16x16xf32>
    %132 = arith.cmpf ogt, %130, %131 : vector<1x16x16xf32>
    %cst_44 = arith.constant 2.000000e-01 : f32
    %133 = vector.broadcast %cst_44 : f32 to vector<1x16x16xf32>
    %134 = arith.mulf %133, %130 : vector<1x16x16xf32>
    %135 = arith.select %132, %130, %134 : vector<1x16x16xi1>, vector<1x16x16xf32>
    %136 = arith.addf %135, %28 : vector<1x16x16xf32>
    %cst_45 = arith.constant dense<0xFF800000> : vector<1x16xf32>
    %137 = vector.multi_reduction <maximumf>, %136, %cst_45 [2] : vector<1x16x16xf32> to vector<1x16xf32>
    %138 = vector.shape_cast %137 : vector<1x16xf32> to vector<1x16x1xf32>
    %139 = vector.broadcast %138 : vector<1x16x1xf32> to vector<1x16x16xf32>
    %140 = arith.subf %136, %139 : vector<1x16x16xf32>
    %141 = math.exp %140 : vector<1x16x16xf32>
    %cst_46 = arith.constant dense<0.000000e+00> : vector<1x16xf32>
    %142 = vector.multi_reduction <add>, %141, %cst_46 [2] : vector<1x16x16xf32> to vector<1x16xf32>
    %143 = vector.shape_cast %142 : vector<1x16xf32> to vector<1x16x1xf32>
    %144 = tpu.reciprocal %143 {approx = true} : vector<1x16x1xf32> -> vector<1x16x1xf32>
    %145 = arith.mulf %143, %144 : vector<1x16x1xf32>
    %cst_47 = arith.constant 2.000000e+00 : f32
    %146 = vector.broadcast %cst_47 : f32 to vector<1x16x1xf32>
    %147 = arith.subf %146, %145 : vector<1x16x1xf32>
    %148 = arith.mulf %144, %147 : vector<1x16x1xf32>
    %149 = vector.broadcast %148 : vector<1x16x1xf32> to vector<1x16x16xf32>
    %150 = arith.mulf %141, %149 : vector<1x16x16xf32>
    "tpu.trace_start"() <{level = 10 : i32, message = "bnm,bmf->bnf"}> : () -> ()
    %cst_48 = arith.constant dense<0.000000e+00> : vector<1x16x8xf32>
    %151 = tpu.matmul %150, %124, %cst_48 {dimension_numbers = #tpu.dot_dimension_numbers<[2], [1], [1], [2], [0, 0, 0, 1, 1, 2], [0], [0]>} : vector<1x16x16xf32>, vector<1x16x8xf32>, vector<1x16x8xf32> -> vector<1x16x8xf32>
    %cst_49 = arith.constant 0.000000e+00 : f32
    "tpu.trace_stop"() : () -> ()
    %152 = vector.broadcast %cst_49 : f32 to vector<1x16x8xf32>
    %153 = arith.cmpf ogt, %151, %152 : vector<1x16x8xf32>
    %154 = math.exp %151 : vector<1x16x8xf32>
    %cst_50 = arith.constant 1.000000e+00 : f32
    %155 = vector.broadcast %cst_50 : f32 to vector<1x16x8xf32>
    %156 = arith.subf %154, %155 : vector<1x16x8xf32>
    %157 = arith.select %153, %151, %156 : vector<1x16x8xi1>, vector<1x16x8xf32>
    %c0_51 = arith.constant 0 : index
    %c0_52 = arith.constant 0 : index
    %c0_53 = arith.constant 0 : index
    %158 = vector.load %arg7[%c0_51, %c0_52, %c0_53] : memref<1x16x8xf32, #tpu.memory_space<vmem>>, vector<1x16x8xf32>
    tpu.vector_store %arg7[%c0_51, %c0_52, %c0_53], %157 {strides = array<i32>} : memref<1x16x8xf32, #tpu.memory_space<vmem>>, vector<1x16x8xf32>,
    return
  }
  func.func @transform_0(%arg0: i32) -> (i32, i32, i32) {
    %c0_i32 = arith.constant 0 : i32
    %c0_i32_0 = arith.constant 0 : i32
    %c0_i32_1 = arith.constant 0 : i32
    return %arg0, %c0_i32, %c0_i32_0 : i32, i32, i32
  }
  func.func @transform_1(%arg0: i32) -> (i32, i32, i32) {
    %c0_i32 = arith.constant 0 : i32
    %c0_i32_0 = arith.constant 0 : i32
    %c0_i32_1 = arith.constant 0 : i32
    return %arg0, %c0_i32, %c0_i32_0 : i32, i32, i32
  }
  func.func @transform_2(%arg0: i32) -> (i32, i32) {
    %c0_i32 = arith.constant 0 : i32
    %c0_i32_0 = arith.constant 0 : i32
    %c0_i32_1 = arith.constant 0 : i32
    return %c0_i32, %c0_i32_0 : i32, i32
  }
  func.func @transform_3(%arg0: i32) -> (i32, i32) {
    %c0_i32 = arith.constant 0 : i32
    %c0_i32_0 = arith.constant 0 : i32
    %c0_i32_1 = arith.constant 0 : i32
    return %c0_i32, %c0_i32_0 : i32, i32
  }
  func.func @transform_4(%arg0: i32) -> (i32, i32) {
    %c0_i32 = arith.constant 0 : i32
    %c0_i32_0 = arith.constant 0 : i32
    %c0_i32_1 = arith.constant 0 : i32
    return %c0_i32, %c0_i32_0 : i32, i32
  }
  func.func @transform_5(%arg0: i32) -> (i32, i32) {
    %c0_i32 = arith.constant 0 : i32
    %c0_i32_0 = arith.constant 0 : i32
    %c0_i32_1 = arith.constant 0 : i32
    return %c0_i32, %c0_i32_0 : i32, i32
  }
  func.func @transform_6(%arg0: i32) -> (i32, i32, i32) {
    %c0_i32 = arith.constant 0 : i32
    %c0_i32_0 = arith.constant 0 : i32
    %c0_i32_1 = arith.constant 0 : i32
    return %arg0, %c0_i32, %c0_i32_0 : i32, i32, i32
  }
}

</mosaic_0001>

<llo_original>
// kernel: tpu_custom_call.1
$region0: #{tpu_custom_call.1}
  #allocation0 [shape = 'u32[]', space=smem, size = 0x4, offset = 0x4, fixed_abs, tag = 'smem constant byte address 0x4 - core index']
  #allocation1 [shape = 'u32[144,128]{1,0:T(1,128)}', space=vmem, size = 0x12000, scoped, tag = 'internal scratch']
  %s0 = inlined_call_operand.vmem [shape: f32[2,16,16], index: 0, kind: input, shape index: {}]
  %s1 = inlined_call_operand.vmem [shape: f32[2,16,3], index: 1, kind: input, shape index: {}]
  %s2 = inlined_call_operand.hbm [shape: f32[16,24], index: 2, kind: input, shape index: {}]
  %s3 = inlined_call_operand.hbm [shape: f32[4,16], index: 3, kind: input, shape index: {}]
  %s4 = inlined_call_operand.vmem [shape: f32[16,14], index: 4, kind: input, shape index: {}]
  %s5 = inlined_call_operand.vmem [shape: f32[4,16], index: 5, kind: input, shape index: {}]
  %s6 = inlined_call_operand.vmem [shape: f32[2,16,8], index: 6, kind: output, shape index: {}]
  %s7 = sld [smem:[#allocation0]]
  $region65: #{tpu_custom_call.1} parent=0
    _
  %s9 = ssub.s32 1, %s7
  %s10 = scalar_select 0, %s9, %s7
  $region1: #{tpu_custom_call.1} parent=0
    #allocation2 [shape = 'u8[8192]{0}', space=vmem, size = 0x2000, scoped, tag = 'input window, operand 2, single buffered']
    #allocation3 [shape = 's32[2]{0}', space=sflag, size = 0x8, scoped, tag = 'scoped memory for tpu_custom_call.1']
    #allocation4 [shape = 'u8[2048]{0}', space=vmem, size = 0x800, scoped, tag = 'input window, operand 3, single buffered']
    #allocation5 [shape = 's32[1]{0}', space=sflag, size = 0x4, scoped, tag = 'scoped memory for tpu_custom_call.1']
    %11 = vsyncpa [#allocation3], 0
    %12 = vsyncpa [#allocation5], 0
    loop: start=0, step=1, limit=4
    $region2: #{tpu_custom_call.1} parent=1 // loop_pre_header
      _
    $region3: #{tpu_custom_call.1} parent=1 // loop_header
      %s14 = sphi 0, %s18
      %p15 = scmp.ge.s32.totalorder %s14, 4
      %s24 = sphi 0, %s26
      %s27 = sphi 0, %s24
      %s28 = sphi 0, %s27
      %s44 = sphi 0, %s28
      %s50 = sphi 0, %s52
      %s53 = sphi 0, %s50
      %s54 = sphi 0, %s53
      %s70 = sphi 0, %s54
      %s74 = sphi 0, %s74
      %s76 = sphi 0, %s74
      %s77 = sphi 0, %s76
      %s91 = sphi 0, %s77
      %s95 = sphi 0, %s95
      %s97 = sphi 0, %s95
      %s98 = sphi 0, %s97
      %s112 = sphi 0, %s98
      %s116 = sphi 0, %s116
      %s118 = sphi 0, %s116
      %s119 = sphi 0, %s118
      %s133 = sphi 0, %s119
      %s137 = sphi 0, %s137
      %s139 = sphi 0, %s137
      %s140 = sphi 0, %s139
      %s154 = sphi 0, %s140
      %s160 = sphi 0, %s162
      %s163 = sphi 0, %s160
      %s164 = sphi 0, %s163
      %s180 = sphi 0, %s164
    $region4: #{tpu_custom_call.1} parent=1 // loop_header_branch
      %17 = sbr.rel (%p15) target = $region8
    $region5: #{tpu_custom_call.1} parent=1 // loop_body
      %s19 = ssub.s32 %s14, 1
      %s20 = ssub.s32 %s14, 2
      %s21 = sadd.s32 %s14, 1
      %s22 = ssub.s32 %s14, %s21
      %p23 = scmp.eq.s32.totalorder %s22, 0
      %s25 = sadd.s32 %s24, 1
      %s26 = scalar_select %p23, %s24, %s25
      %p29 = pneg %p23
      %p30 = scmp.eq.s32.totalorder %s14, 1
      %p31 = por %p29, %p30
      %p32 = scmp.ne.s32.totalorder %s24, %s27
      %p33 = scmp.eq.s32.totalorder %s14, 0
      %p34 = por %p32, %p33
      %p35 = scmp.ne.s32.totalorder %s24, %s27
      %p36 = scmp.eq.s32.totalorder %s19, 1
      %p37 = por %p35, %p36
      %p38 = scmp.ne.s32.totalorder %s27, %s28
      %p39 = scmp.eq.s32.totalorder %s19, 0
      %p40 = por %p38, %p39
      %p41 = scmp.ne.s32.totalorder %s27, %s28
      %p42 = scmp.eq.s32.totalorder %s20, 1
      %p43 = por %p41, %p42
      %p45 = scmp.ne.s32.totalorder %s28, %s44
      %p46 = scmp.eq.s32.totalorder %s20, 0
      %p47 = por %p45, %p46
      %s48 = ssub.s32 %s14, %s21
      %p49 = scmp.eq.s32.totalorder %s48, 0
      %s51 = sadd.s32 %s50, 1
      %s52 = scalar_select %p49, %s50, %s51
      %p55 = pneg %p49
      %p56 = scmp.eq.s32.totalorder %s14, 1
      %p57 = por %p55, %p56
      %p58 = scmp.ne.s32.totalorder %s50, %s53
      %p59 = scmp.eq.s32.totalorder %s14, 0
      %p60 = por %p58, %p59
      %p61 = scmp.ne.s32.totalorder %s50, %s53
      %p62 = scmp.eq.s32.totalorder %s19, 1
      %p63 = por %p61, %p62
      %p64 = scmp.ne.s32.totalorder %s53, %s54
      %p65 = scmp.eq.s32.totalorder %s19, 0
      %p66 = por %p64, %p65
      %p67 = scmp.ne.s32.totalorder %s53, %s54
      %p68 = scmp.eq.s32.totalorder %s20, 1
      %p69 = por %p67, %p68
      %p71 = scmp.ne.s32.totalorder %s54, %s70
      %p72 = scmp.eq.s32.totalorder %s20, 0
      %p73 = por %p71, %p72
      %s75 = sadd.s32 %s74, 1
      %p78 = scmp.eq.s32.totalorder %s14, 1
      %p79 = scmp.ne.s32.totalorder %s74, %s76
      %p80 = scmp.eq.s32.totalorder %s14, 0
      %p81 = por %p79, %p80
      %p82 = scmp.ne.s32.totalorder %s74, %s76
      %p83 = scmp.eq.s32.totalorder %s19, 1
      %p84 = por %p82, %p83
      %p85 = scmp.ne.s32.totalorder %s76, %s77
      %p86 = scmp.eq.s32.totalorder %s19, 0
      %p87 = por %p85, %p86
      %p88 = scmp.ne.s32.totalorder %s76, %s77
      %p89 = scmp.eq.s32.totalorder %s20, 1
      %p90 = por %p88, %p89
      %p92 = scmp.ne.s32.totalorder %s77, %s91
      %p93 = scmp.eq.s32.totalorder %s20, 0
      %p94 = por %p92, %p93
      %s96 = sadd.s32 %s95, 1
      %p99 = scmp.eq.s32.totalorder %s14, 1
      %p100 = scmp.ne.s32.totalorder %s95, %s97
      %p101 = scmp.eq.s32.totalorder %s14, 0
      %p102 = por %p100, %p101
      %p103 = scmp.ne.s32.totalorder %s95, %s97
      %p104 = scmp.eq.s32.totalorder %s19, 1
      %p105 = por %p103, %p104
      %p106 = scmp.ne.s32.totalorder %s97, %s98
      %p107 = scmp.eq.s32.totalorder %s19, 0
      %p108 = por %p106, %p107
      %p109 = scmp.ne.s32.totalorder %s97, %s98
      %p110 = scmp.eq.s32.totalorder %s20, 1
      %p111 = por %p109, %p110
      %p113 = scmp.ne.s32.totalorder %s98, %s112
      %p114 = scmp.eq.s32.totalorder %s20, 0
      %p115 = por %p113, %p114
      %s117 = sadd.s32 %s116, 1
      %p120 = scmp.eq.s32.totalorder %s14, 1
      %p121 = scmp.ne.s32.totalorder %s116, %s118
      %p122 = scmp.eq.s32.totalorder %s14, 0
      %p123 = por %p121, %p122
      %p124 = scmp.ne.s32.totalorder %s116, %s118
      %p125 = scmp.eq.s32.totalorder %s19, 1
      %p126 = por %p124, %p125
      %p127 = scmp.ne.s32.totalorder %s118, %s119
      %p128 = scmp.eq.s32.totalorder %s19, 0
      %p129 = por %p127, %p128
      %p130 = scmp.ne.s32.totalorder %s118, %s119
      %p131 = scmp.eq.s32.totalorder %s20, 1
      %p132 = por %p130, %p131
      %p134 = scmp.ne.s32.totalorder %s119, %s133
      %p135 = scmp.eq.s32.totalorder %s20, 0
      %p136 = por %p134, %p135
      %s138 = sadd.s32 %s137, 1
      %p141 = scmp.eq.s32.totalorder %s14, 1
      %p142 = scmp.ne.s32.totalorder %s137, %s139
      %p143 = scmp.eq.s32.totalorder %s14, 0
      %p144 = por %p142, %p143
      %p145 = scmp.ne.s32.totalorder %s137, %s139
      %p146 = scmp.eq.s32.totalorder %s19, 1
      %p147 = por %p145, %p146
      %p148 = scmp.ne.s32.totalorder %s139, %s140
      %p149 = scmp.eq.s32.totalorder %s19, 0
      %p150 = por %p148, %p149
      %p151 = scmp.ne.s32.totalorder %s139, %s140
      %p152 = scmp.eq.s32.totalorder %s20, 1
      %p153 = por %p151, %p152
      %p155 = scmp.ne.s32.totalorder %s140, %s154
      %p156 = scmp.eq.s32.totalorder %s20, 0
      %p157 = por %p155, %p156
      %s158 = ssub.s32 %s14, %s21
      %p159 = scmp.eq.s32.totalorder %s158, 0
      %s161 = sadd.s32 %s160, 1
      %s162 = scalar_select %p159, %s160, %s161
      %p165 = pneg %p159
      %p166 = scmp.eq.s32.totalorder %s14, 1
      %p167 = por %p165, %p166
      %p168 = scmp.ne.s32.totalorder %s160, %s163
      %p169 = scmp.eq.s32.totalorder %s14, 0
      %p170 = por %p168, %p169
      %p171 = scmp.ne.s32.totalorder %s160, %s163
      %p172 = scmp.eq.s32.totalorder %s19, 1
      %p173 = por %p171, %p172
      %p174 = scmp.ne.s32.totalorder %s163, %s164
      %p175 = scmp.eq.s32.totalorder %s19, 0
      %p176 = por %p174, %p175
      %p177 = scmp.ne.s32.totalorder %s163, %s164
      %p178 = scmp.eq.s32.totalorder %s20, 1
      %p179 = por %p177, %p178
      %p181 = scmp.ne.s32.totalorder %s164, %s180
      %p182 = scmp.eq.s32.totalorder %s20, 0
      %p183 = por %p181, %p182
      %p184 = scmp.le.s32.totalorder 1, %s14
      %p185 = scmp.lt.s32.totalorder %s14, 3
      %p186 = pnand %p184, %p185
      %p187 = pneg %p186
      // Predicated region
      $region9: #{tpu_custom_call.1} parent=5 // pred_check
        _
      $region10: #{tpu_custom_call.1} parent=5 // pred_check_branch
        %189 = sbr.rel (%p186) target = $region12
      $region11: #{tpu_custom_call.1} parent=5 // pred_region
        %s190 = ssub.s32 %s14, 1
        // Predicated region
        $region13: #{tpu_custom_call.1} parent=11 // pred_check
          %p191 = pneg %p87
        $region14: #{tpu_custom_call.1} parent=11 // pred_check_branch
          %193 = sbr.rel (%p191) target = $region16
        $region15: #{tpu_custom_call.1} parent=11 // pred_region
          %s195 = ssub.s32 256, 256
          %196 = vsyncadd [#allocation3], %s195
          %s197 = sshll.u32 [#allocation2], 4
          %s198 = int_to_ptr.vmem [resolvable:$true] %s197
          %203 = dma.hbm_to_vmem [thread:$0]  %s2, 256, %s198, [#allocation3], 128, 128, 8
        $region16: #{tpu_custom_call.1} parent=11 // pred_fallthru
          _
        // Predicated region
        $region17: #{tpu_custom_call.1} parent=11 // pred_check
          %p204 = pneg %p108
        $region18: #{tpu_custom_call.1} parent=11 // pred_check_branch
          %206 = sbr.rel (%p204) target = $region20
        $region19: #{tpu_custom_call.1} parent=11 // pred_region
          %s208 = ssub.s32 64, 64
          %209 = vsyncadd [#allocation5], %s208
          %s211 = sshll.u32 [#allocation4], 4
          %s212 = int_to_ptr.vmem [resolvable:$true] %s211
          %214 = dma.hbm_to_vmem [thread:$0]  %s3, 64, %s212, [#allocation5]
        $region20: #{tpu_custom_call.1} parent=11 // pred_fallthru
          _
        // Predicated region
        $region21: #{tpu_custom_call.1} parent=11 // pred_check
          %p215 = pneg %p129
        $region22: #{tpu_custom_call.1} parent=11 // pred_check_branch
          %217 = sbr.rel (%p215) target = $region24
        $region23: #{tpu_custom_call.1} parent=11 // pred_region
          _
        $region24: #{tpu_custom_call.1} parent=11 // pred_fallthru
          _
        // Predicated region
        $region25: #{tpu_custom_call.1} parent=11 // pred_check
          %p218 = pneg %p150
        $region26: #{tpu_custom_call.1} parent=11 // pred_check_branch
          %220 = sbr.rel (%p218) target = $region28
        $region27: #{tpu_custom_call.1} parent=11 // pred_region
          _
        $region28: #{tpu_custom_call.1} parent=11 // pred_fallthru
          _
      $region12: #{tpu_custom_call.1} parent=5 // pred_fallthru
        _
      %p221 = scmp.lt.s32.totalorder %s14, 2
      // Predicated region
      $region29: #{tpu_custom_call.1} parent=5 // pred_check
        %p222 = pneg %p221
      $region30: #{tpu_custom_call.1} parent=5 // pred_check_branch
        %224 = sbr.rel (%p222) target = $region32
      $region31: #{tpu_custom_call.1} parent=5 // pred_region
        // Predicated region
        $region33: #{tpu_custom_call.1} parent=31 // pred_check
          %p225 = pneg %p34
        $region34: #{tpu_custom_call.1} parent=31 // pred_check_branch
          %227 = sbr.rel (%p225) target = $region36
        $region35: #{tpu_custom_call.1} parent=31 // pred_region
          %p228 = scmp.lt.s32.totalorder %s14, 1
          %s229 = scalar_select %p228, %s14, 1
          %s230 = smul.addr %s229, 2
          %s231 = smul.addr %s230, 8
          %s232 = scalar_lea.vmem %s0, %s231
        $region36: #{tpu_custom_call.1} parent=31 // pred_fallthru
          _
        // Predicated region
        $region37: #{tpu_custom_call.1} parent=31 // pred_check
          %p233 = pneg %p60
        $region38: #{tpu_custom_call.1} parent=31 // pred_check_branch
          %235 = sbr.rel (%p233) target = $region40
        $region39: #{tpu_custom_call.1} parent=31 // pred_region
          %p236 = scmp.lt.s32.totalorder %s14, 1
          %s237 = scalar_select %p236, %s14, 1
          %s238 = smul.addr %s237, 2
          %s239 = smul.addr %s238, 8
          %s240 = scalar_lea.vmem %s1, %s239
        $region40: #{tpu_custom_call.1} parent=31 // pred_fallthru
          _
      $region32: #{tpu_custom_call.1} parent=5 // pred_fallthru
        _
      %p241 = scmp.le.s32.totalorder 1, %s14
      %p242 = scmp.lt.s32.totalorder %s14, 3
      %p243 = pnand %p241, %p242
      %p244 = pneg %p243
      // Predicated region
      $region41: #{tpu_custom_call.1} parent=5 // pred_check
        _
      $region42: #{tpu_custom_call.1} parent=5 // pred_check_branch
        %246 = sbr.rel (%p243) target = $region44
      $region43: #{tpu_custom_call.1} parent=5 // pred_region
        %s247 = ssub.s32 %s14, 1
        // Predicated region
        $region45: #{tpu_custom_call.1} parent=43 // pred_check
          %p248 = pneg %p87
        $region46: #{tpu_custom_call.1} parent=43 // pred_check_branch
          %250 = sbr.rel (%p248) target = $region48
        $region47: #{tpu_custom_call.1} parent=43 // pred_region
          %251 = dma.done [#allocation3], 256
        $region48: #{tpu_custom_call.1} parent=43 // pred_fallthru
          _
        // Predicated region
        $region49: #{tpu_custom_call.1} parent=43 // pred_check
          %p252 = pneg %p108
        $region50: #{tpu_custom_call.1} parent=43 // pred_check_branch
          %254 = sbr.rel (%p252) target = $region52
        $region51: #{tpu_custom_call.1} parent=43 // pred_region
          %255 = dma.done [#allocation5], 64
        $region52: #{tpu_custom_call.1} parent=43 // pred_fallthru
          _
        %p256 = scmp.lt.s32.totalorder %s19, 1
        %s257 = scalar_select %p256, %s19, 1
        %s258 = smul.addr %s257, 2
        %s259 = smul.addr %s258, 8
        %s260 = scalar_lea.vmem %s0, %s259
        %p261 = pneg %p40
        %p262 = pneg %p37
        %p263 = scmp.lt.s32.totalorder %s19, 1
        %s264 = scalar_select %p263, %s19, 1
        %s265 = smul.addr %s264, 2
        %s266 = smul.addr %s265, 8
        %s267 = scalar_lea.vmem %s1, %s266
        %p268 = pneg %p66
        %p269 = pneg %p63
        %p270 = pneg %p87
        %p271 = pneg %p84
        %p272 = pneg %p108
        %p273 = pneg %p105
        %p274 = pneg %p129
        %p275 = pneg %p126
        %p276 = pneg %p150
        %p277 = pneg %p147
        %p278 = pneg %p176
        %p279 = pneg %p173
        %p280 = scmp.lt.s32.totalorder %s19, 1
        %s281 = scalar_select %p280, %s19, 1
        %s282 = smul.addr %s281, 2
        %s283 = smul.addr %s282, 8
        %s284 = scalar_lea.vmem %s6, %s283
        %p285 = scmp.lt.s32.totalorder %s19, 1
        %s286 = scalar_select %p285, %s19, 1
        %s287 = smul.addr %s286, 2
        %s288 = smul.addr %s287, 8
        %s289 = scalar_lea.vmem %s0, %s288
        %p290 = scmp.lt.s32.totalorder %s19, 1
        %s291 = scalar_select %p290, %s19, 1
        %s292 = smul.addr %s291, 2
        %s293 = smul.addr %s292, 8
        %s294 = scalar_lea.vmem %s1, %s293
        %p295 = scmp.lt.s32.totalorder %s19, 1
        %s296 = scalar_select %p295, %s19, 1
        %s297 = smul.addr %s296, 2
        %s298 = smul.addr %s297, 8
        %s299 = scalar_lea.vmem %s6, %s298
        %v300 = vld [vmem:[%s289] sm:$0xff]
        %v301 = vld [vmem:[%s289 + $0x8] sm:$0xff]
        %v302 = vld [vmem:[%s294] sm:$0xff]
        %v303 = vld [vmem:[%s294 + $0x8] sm:$0xff]
        %304 = vxpose.xlu0.b32.start [1/16] %v302, 128
        %305 = vxpose.xlu0.b32.cont [2/16] %v303, 128
        %306 = vxpose.xlu0.b32.cont [3/16] 0.0, 128
        %307 = vxpose.xlu0.b32.cont [4/16] 0.0, 128
        %308 = vxpose.xlu0.b32.cont [5/16] 0.0, 128
        %309 = vxpose.xlu0.b32.cont [6/16] 0.0, 128
        %310 = vxpose.xlu0.b32.cont [7/16] 0.0, 128
        %311 = vxpose.xlu0.b32.cont [8/16] 0.0, 128
        %312 = vxpose.xlu0.b32.cont [9/16] 0.0, 128
        %313 = vxpose.xlu0.b32.cont [10/16] 0.0, 128
        %314 = vxpose.xlu0.b32.cont [11/16] 0.0, 128
        %315 = vxpose.xlu0.b32.cont [12/16] 0.0, 128
        %316 = vxpose.xlu0.b32.cont [13/16] 0.0, 128
        %317 = vxpose.xlu0.b32.cont [14/16] 0.0, 128
        %318 = vxpose.xlu0.b32.cont [15/16] 0.0, 128
        %319 = vxpose.xlu0.b32.end [16/16] 0.0, 128
        %v320 = vpop.trf.xlu0
        %v321 = vpop.trf.xlu0
        %v322 = vpop.trf.xlu0
        %v323 = vpop.trf.xlu0
        %v324 = vpop.trf.xlu0
        %v325 = vpop.trf.xlu0
        %v326 = vpop.trf.xlu0
        %v327 = vpop.trf.xlu0
        %v328 = vpop.trf.xlu0
        %v329 = vpop.trf.xlu0
        %v330 = vpop.trf.xlu0
        %v331 = vpop.trf.xlu0
        %v332 = vpop.trf.xlu0
        %v333 = vpop.trf.xlu0
        %v334 = vpop.trf.xlu0
        %v335 = vpop.trf.xlu0
        %337 = vset.pattern.permute.xlu0 0
        %338 = vperm.xlu0 %337, %v302
        %v339 = vpop.permute.xlu0 %338
        %342 = vset.pattern.permute.xlu0 0
        %343 = vperm.xlu0 %342, %v303
        %v344 = vpop.permute.xlu0 %343
        %v346 = vlaneseq
        %v347 = vshrl.u32 %v346, 7
        %v348 = vsub.s32 0, %v347
        %v349 = vrot.slane %v320, %v348
        %v350 = vsub.f32 %v339, %v349
        %v351 = vsub.f32 %v344, %v349
        %v352 = vmul.f32 %v350, %v350
        %v353 = vmul.f32 %v351, %v351
        %v354 = vadd.f32 %v352, 0.0
        %v355 = vadd.f32 %v353, 0.0
        %356 = vrot.lane.b32.xlu0 %v302, 127
        %v357 = vpop.permute.xlu0 %356
        %358 = vrot.lane.b32.xlu0 %v303, 127
        %v359 = vpop.permute.xlu0 %358
        %362 = vxpose.xlu0.b32.start [1/16] %v357, 128
        %363 = vxpose.xlu0.b32.cont [2/16] %v359, 128
        %364 = vxpose.xlu0.b32.cont [3/16] 0.0, 128
        %365 = vxpose.xlu0.b32.cont [4/16] 0.0, 128
        %366 = vxpose.xlu0.b32.cont [5/16] 0.0, 128
        %367 = vxpose.xlu0.b32.cont [6/16] 0.0, 128
        %368 = vxpose.xlu0.b32.cont [7/16] 0.0, 128
        %369 = vxpose.xlu0.b32.cont [8/16] 0.0, 128
        %370 = vxpose.xlu0.b32.cont [9/16] 0.0, 128
        %371 = vxpose.xlu0.b32.cont [10/16] 0.0, 128
        %372 = vxpose.xlu0.b32.cont [11/16] 0.0, 128
        %373 = vxpose.xlu0.b32.cont [12/16] 0.0, 128
        %374 = vxpose.xlu0.b32.cont [13/16] 0.0, 128
        %375 = vxpose.xlu0.b32.cont [14/16] 0.0, 128
        %376 = vxpose.xlu0.b32.cont [15/16] 0.0, 128
        %377 = vxpose.xlu0.b32.end [16/16] 0.0, 128
        %v378 = vpop.trf.xlu0
        %v379 = vpop.trf.xlu0
        %v380 = vpop.trf.xlu0
        %v381 = vpop.trf.xlu0
        %v382 = vpop.trf.xlu0
        %v383 = vpop.trf.xlu0
        %v384 = vpop.trf.xlu0
        %v385 = vpop.trf.xlu0
        %v386 = vpop.trf.xlu0
        %v387 = vpop.trf.xlu0
        %v388 = vpop.trf.xlu0
        %v389 = vpop.trf.xlu0
        %v390 = vpop.trf.xlu0
        %v391 = vpop.trf.xlu0
        %v392 = vpop.trf.xlu0
        %v393 = vpop.trf.xlu0
        %394 = vset.pattern.permute.xlu0 1
        %395 = vperm.xlu0 %394, %v302
        %v396 = vpop.permute.xlu0 %395
        %398 = vset.pattern.permute.xlu0 1
        %399 = vperm.xlu0 %398, %v303
        %v400 = vpop.permute.xlu0 %399
        %v402 = vlaneseq
        %v403 = vshrl.u32 %v402, 7
        %v404 = vsub.s32 0, %v403
        %v405 = vrot.slane %v378, %v404
        %v406 = vsub.f32 %v396, %v405
        %v407 = vsub.f32 %v400, %v405
        %v408 = vmul.f32 %v406, %v406
        %v409 = vmul.f32 %v407, %v407
        %v410 = vadd.f32 %v354, %v408
        %v411 = vadd.f32 %v355, %v409
        %412 = vrot.lane.b32.xlu0 %v302, 126
        %v413 = vpop.permute.xlu0 %412
        %414 = vrot.lane.b32.xlu0 %v303, 126
        %v415 = vpop.permute.xlu0 %414
        %418 = vxpose.xlu0.b32.start [1/16] %v413, 128
        %419 = vxpose.xlu0.b32.cont [2/16] %v415, 128
        %420 = vxpose.xlu0.b32.cont [3/16] 0.0, 128
        %421 = vxpose.xlu0.b32.cont [4/16] 0.0, 128
        %422 = vxpose.xlu0.b32.cont [5/16] 0.0, 128
        %423 = vxpose.xlu0.b32.cont [6/16] 0.0, 128
        %424 = vxpose.xlu0.b32.cont [7/16] 0.0, 128
        %425 = vxpose.xlu0.b32.cont [8/16] 0.0, 128
        %426 = vxpose.xlu0.b32.cont [9/16] 0.0, 128
        %427 = vxpose.xlu0.b32.cont [10/16] 0.0, 128
        %428 = vxpose.xlu0.b32.cont [11/16] 0.0, 128
        %429 = vxpose.xlu0.b32.cont [12/16] 0.0, 128
        %430 = vxpose.xlu0.b32.cont [13/16] 0.0, 128
        %431 = vxpose.xlu0.b32.cont [14/16] 0.0, 128
        %432 = vxpose.xlu0.b32.cont [15/16] 0.0, 128
        %433 = vxpose.xlu0.b32.end [16/16] 0.0, 128
        %v434 = vpop.trf.xlu0
        %v435 = vpop.trf.xlu0
        %v436 = vpop.trf.xlu0
        %v437 = vpop.trf.xlu0
        %v438 = vpop.trf.xlu0
        %v439 = vpop.trf.xlu0
        %v440 = vpop.trf.xlu0
        %v441 = vpop.trf.xlu0
        %v442 = vpop.trf.xlu0
        %v443 = vpop.trf.xlu0
        %v444 = vpop.trf.xlu0
        %v445 = vpop.trf.xlu0
        %v446 = vpop.trf.xlu0
        %v447 = vpop.trf.xlu0
        %v448 = vpop.trf.xlu0
        %v449 = vpop.trf.xlu0
        %450 = vset.pattern.permute.xlu0 2
        %451 = vperm.xlu0 %450, %v302
        %v452 = vpop.permute.xlu0 %451
        %454 = vset.pattern.permute.xlu0 2
        %455 = vperm.xlu0 %454, %v303
        %v456 = vpop.permute.xlu0 %455
        %v458 = vlaneseq
        %v459 = vshrl.u32 %v458, 7
        %v460 = vsub.s32 0, %v459
        %v461 = vrot.slane %v434, %v460
        %v462 = vsub.f32 %v452, %v461
        %v463 = vsub.f32 %v456, %v461
        %v464 = vmul.f32 %v462, %v462
        %v465 = vmul.f32 %v463, %v463
        %v466 = vadd.f32 %v410, %v464
        %v467 = vadd.f32 %v411, %v465
        %vm468 = vcmp.lt.f32.partialorder %v466, 2.25
        %vm469 = vcmp.lt.f32.partialorder %v467, 2.25
        %v470 = vsel %vm468, 0.0, -9e+15
        %v471 = vsel %vm469, 0.0, -9e+15
        %v472 = vld [vmem:[#allocation2] sm:$0xff]
        %v473 = vld [vmem:[#allocation2 + $0x8] sm:$0xff]
        %v474 = vld [vmem:[#allocation4] sm:$0xf]
        %vm475 = vcmask 130048
        %v476 = vsel %vm475, %v300, 0.0
        %v477 = vsel %vm475, %v301, 0.0
        %v478 = vadd.f32 %v476, %v477
        %v479 = vrot.slane %v478, 4
        %v480 = vadd.f32 %v478, %v479
        %v481 = vrot.slane %v480, 2
        %v482 = vadd.f32 %v480, %v481
        %v483 = vrot.slane %v482, 1
        %v484 = vadd.f32 %v482, %v483
        %v485 = vrcp.pop 16.0
        %v486 = vmul.f32 %v484, %v485
        %489 = vrot.lane.b32.xlu0 %v472, 108
        %v490 = vpop.permute.xlu0 %489
        %491 = vrot.lane.b32.xlu0 %v473, 108
        %v492 = vpop.permute.xlu0 %491
        %v496 = vsel %vm475, %v486, 0
        %498 = vmatprep.subr.mxu0 0.0
        %499 = vmatpush1.msra.mxu0 %v490
        %500 = vmatprep.subr.mxu0 0.0
        %501 = vmatpush1.msra.mxu0 %v492
        %502 = vmatprep.subr.mxu0 0.0
        %503 = vmatpush1.msra.mxu0 0.0
        %504 = vmatprep.subr.mxu0 0.0
        %505 = vmatpush1.msra.mxu0 0.0
        %506 = vmatprep.subr.mxu0 0.0
        %507 = vmatpush1.msra.mxu0 0.0
        %508 = vmatprep.subr.mxu0 0.0
        %509 = vmatpush1.msra.mxu0 0.0
        %510 = vmatprep.subr.mxu0 0.0
        %511 = vmatpush1.msra.mxu0 0.0
        %512 = vmatprep.subr.mxu0 0.0
        %513 = vmatpush1.msra.mxu0 0.0
        %514 = vmatprep.subr.mxu0 0.0
        %515 = vmatpush1.msra.mxu0 0.0
        %516 = vmatprep.subr.mxu0 0.0
        %517 = vmatpush1.msra.mxu0 0.0
        %518 = vmatprep.subr.mxu0 0.0
        %519 = vmatpush1.msra.mxu0 0.0
        %520 = vmatprep.subr.mxu0 0.0
        %521 = vmatpush1.msra.mxu0 0.0
        %522 = vmatprep.subr.mxu0 0.0
        %523 = vmatpush1.msra.mxu0 0.0
        %524 = vmatprep.subr.mxu0 0.0
        %525 = vmatpush1.msra.mxu0 0.0
        %526 = vmatprep.subr.mxu0 0.0
        %527 = vmatpush1.msra.mxu0 0.0
        %528 = vmatprep.subr.mxu0 0.0
        %529 = vmatpush1.msra.mxu0 0.0
        %530 = vmatprep.subr.mxu0 0.0
        %531 = vmatpush1.msra.mxu0 0.0
        %532 = vmatprep.subr.mxu0 0.0
        %533 = vmatpush1.msra.mxu0 0.0
        %534 = vmatprep.subr.mxu0 0.0
        %535 = vmatpush1.msra.mxu0 0.0
        %536 = vmatprep.subr.mxu0 0.0
        %537 = vmatpush1.msra.mxu0 0.0
        %538 = vmatprep.subr.mxu0 0.0
        %539 = vmatpush1.msra.mxu0 0.0
        %540 = vmatprep.subr.mxu0 0.0
        %541 = vmatpush1.msra.mxu0 0.0
        %542 = vmatprep.subr.mxu0 0.0
        %543 = vmatpush1.msra.mxu0 0.0
        %544 = vmatprep.subr.mxu0 0.0
        %545 = vmatpush1.msra.mxu0 0.0
        %546 = vmatprep.subr.mxu0 0.0
        %547 = vmatpush1.msra.mxu0 0.0
        %548 = vmatprep.subr.mxu0 0.0
        %549 = vmatpush1.msra.mxu0 0.0
        %550 = vmatprep.subr.mxu0 0.0
        %551 = vmatpush1.msra.mxu0 0.0
        %552 = vmatprep.subr.mxu0 0.0
        %553 = vmatpush1.msra.mxu0 0.0
        %554 = vmatprep.subr.mxu0 0.0
        %555 = vmatpush1.msra.mxu0 0.0
        %556 = vmatprep.subr.mxu0 0.0
        %557 = vmatpush1.msra.mxu0 0.0
        %558 = vmatprep.subr.mxu0 0.0
        %559 = vmatpush1.msra.mxu0 0.0
        %560 = vmatprep.subr.mxu0 0.0
        %561 = vmatpush1.msra.mxu0 0.0
        %562 = vmatprep.mubr.f32.mxu0 0.0
        %563 = vmatmul.mubr.f32.gmra.mrb[0].mxu0 %v496
        %v564 = vpop.f32.mrb[0].mxu0
        %v565 = vadd.f32 0.0, %v564
        %v566 = vpop.f32.mrb[0].mxu0
        %567 = vdwg.mxu0
        %v568 = vmax.f32 %v565, 0.0
        %vm569 = vcmask 31744
        %v571 = vsel %vm569, %v568, 0
        %vm573 = vcmask 1043456
        %v575 = vsel %vm573, %v474, 0
        %577 = vmatprep.subr.mxu0 0.0
        %578 = vmatpush1.msra.mxu0 %v575
        %579 = vmatprep.subr.mxu0 0.0
        %580 = vmatpush1.msra.mxu0 0.0
        %581 = vmatprep.subr.mxu0 0.0
        %582 = vmatpush1.msra.mxu0 0.0
        %583 = vmatprep.subr.mxu0 0.0
        %584 = vmatpush1.msra.mxu0 0.0
        %585 = vmatprep.subr.mxu0 0.0
        %586 = vmatpush1.msra.mxu0 0.0
        %587 = vmatprep.subr.mxu0 0.0
        %588 = vmatpush1.msra.mxu0 0.0
        %589 = vmatprep.subr.mxu0 0.0
        %590 = vmatpush1.msra.mxu0 0.0
        %591 = vmatprep.subr.mxu0 0.0
        %592 = vmatpush1.msra.mxu0 0.0
        %593 = vmatprep.subr.mxu0 0.0
        %594 = vmatpush1.msra.mxu0 0.0
        %595 = vmatprep.subr.mxu0 0.0
        %596 = vmatpush1.msra.mxu0 0.0
        %597 = vmatprep.subr.mxu0 0.0
        %598 = vmatpush1.msra.mxu0 0.0
        %599 = vmatprep.subr.mxu0 0.0
        %600 = vmatpush1.msra.mxu0 0.0
        %601 = vmatprep.subr.mxu0 0.0
        %602 = vmatpush1.msra.mxu0 0.0
        %603 = vmatprep.subr.mxu0 0.0
        %604 = vmatpush1.msra.mxu0 0.0
        %605 = vmatprep.subr.mxu0 0.0
        %606 = vmatpush1.msra.mxu0 0.0
        %607 = vmatprep.subr.mxu0 0.0
        %608 = vmatpush1.msra.mxu0 0.0
        %609 = vmatprep.subr.mxu0 0.0
        %610 = vmatpush1.msra.mxu0 0.0
        %611 = vmatprep.subr.mxu0 0.0
        %612 = vmatpush1.msra.mxu0 0.0
        %613 = vmatprep.subr.mxu0 0.0
        %614 = vmatpush1.msra.mxu0 0.0
        %615 = vmatprep.subr.mxu0 0.0
        %616 = vmatpush1.msra.mxu0 0.0
        %617 = vmatprep.subr.mxu0 0.0
        %618 = vmatpush1.msra.mxu0 0.0
        %619 = vmatprep.subr.mxu0 0.0
        %620 = vmatpush1.msra.mxu0 0.0
        %621 = vmatprep.subr.mxu0 0.0
        %622 = vmatpush1.msra.mxu0 0.0
        %623 = vmatprep.subr.mxu0 0.0
        %624 = vmatpush1.msra.mxu0 0.0
        %625 = vmatprep.subr.mxu0 0.0
        %626 = vmatpush1.msra.mxu0 0.0
        %627 = vmatprep.subr.mxu0 0.0
        %628 = vmatpush1.msra.mxu0 0.0
        %629 = vmatprep.subr.mxu0 0.0
        %630 = vmatpush1.msra.mxu0 0.0
        %631 = vmatprep.subr.mxu0 0.0
        %632 = vmatpush1.msra.mxu0 0.0
        %633 = vmatprep.subr.mxu0 0.0
        %634 = vmatpush1.msra.mxu0 0.0
        %635 = vmatprep.subr.mxu0 0.0
        %636 = vmatpush1.msra.mxu0 0.0
        %637 = vmatprep.subr.mxu0 0.0
        %638 = vmatpush1.msra.mxu0 0.0
        %639 = vmatprep.subr.mxu0 0.0
        %640 = vmatpush1.msra.mxu0 0.0
        %641 = vmatprep.mubr.f32.mxu0 0.0
        %642 = vmatmul.mubr.f32.gmra.mrb[0].mxu0 %v571
        %v643 = vpop.f32.mrb[0].mxu0
        %v644 = vadd.f32 0.0, %v643
        %v645 = vpop.f32.mrb[0].mxu0
        %646 = vdwg.mxu0
        %v647 = vxor.u32 %v644, 2147483648
        %v648 = vmul.f32 %v647, 1.442695
        %v649 = vpow.pop %v648
        %v650 = vadd.f32 %v649, 1.0
        %v651 = vrcp.pop %v650
        %v652 = vmul.f32 1.0, %v651
        %v653 = vlaneseq
        %v654 = vshrl.u32 %v653, 7
        %v655 = vsub.s32 0, %v654
        %v656 = vrot.slane %v652, %v655
        %v657 = vmul.f32 %v300, %v656
        %v658 = vmul.f32 %v301, %v656
        %v660 = vsel %vm475, %v657, 0
        %v663 = vsel %vm475, %v658, 0
        %665 = vmatprep.subr.mxu0 0.0
        %666 = vmatpush1.msra.mxu0 %v472
        %667 = vmatprep.subr.mxu0 0.0
        %668 = vmatpush1.msra.mxu0 %v473
        %669 = vmatprep.subr.mxu0 0.0
        %670 = vmatpush1.msra.mxu0 0.0
        %671 = vmatprep.subr.mxu0 0.0
        %672 = vmatpush1.msra.mxu0 0.0
        %673 = vmatprep.subr.mxu0 0.0
        %674 = vmatpush1.msra.mxu0 0.0
        %675 = vmatprep.subr.mxu0 0.0
        %676 = vmatpush1.msra.mxu0 0.0
        %677 = vmatprep.subr.mxu0 0.0
        %678 = vmatpush1.msra.mxu0 0.0
        %679 = vmatprep.subr.mxu0 0.0
        %680 = vmatpush1.msra.mxu0 0.0
        %681 = vmatprep.subr.mxu0 0.0
        %682 = vmatpush1.msra.mxu0 0.0
        %683 = vmatprep.subr.mxu0 0.0
        %684 = vmatpush1.msra.mxu0 0.0
        %685 = vmatprep.subr.mxu0 0.0
        %686 = vmatpush1.msra.mxu0 0.0
        %687 = vmatprep.subr.mxu0 0.0
        %688 = vmatpush1.msra.mxu0 0.0
        %689 = vmatprep.subr.mxu0 0.0
        %690 = vmatpush1.msra.mxu0 0.0
        %691 = vmatprep.subr.mxu0 0.0
        %692 = vmatpush1.msra.mxu0 0.0
        %693 = vmatprep.subr.mxu0 0.0
        %694 = vmatpush1.msra.mxu0 0.0
        %695 = vmatprep.subr.mxu0 0.0
        %696 = vmatpush1.msra.mxu0 0.0
        %697 = vmatprep.subr.mxu0 0.0
        %698 = vmatpush1.msra.mxu0 0.0
        %699 = vmatprep.subr.mxu0 0.0
        %700 = vmatpush1.msra.mxu0 0.0
        %701 = vmatprep.subr.mxu0 0.0
        %702 = vmatpush1.msra.mxu0 0.0
        %703 = vmatprep.subr.mxu0 0.0
        %704 = vmatpush1.msra.mxu0 0.0
        %705 = vmatprep.subr.mxu0 0.0
        %706 = vmatpush1.msra.mxu0 0.0
        %707 = vmatprep.subr.mxu0 0.0
        %708 = vmatpush1.msra.mxu0 0.0
        %709 = vmatprep.subr.mxu0 0.0
        %710 = vmatpush1.msra.mxu0 0.0
        %711 = vmatprep.subr.mxu0 0.0
        %712 = vmatpush1.msra.mxu0 0.0
        %713 = vmatprep.subr.mxu0 0.0
        %714 = vmatpush1.msra.mxu0 0.0
        %715 = vmatprep.subr.mxu0 0.0
        %716 = vmatpush1.msra.mxu0 0.0
        %717 = vmatprep.subr.mxu0 0.0
        %718 = vmatpush1.msra.mxu0 0.0
        %719 = vmatprep.subr.mxu0 0.0
        %720 = vmatpush1.msra.mxu0 0.0
        %721 = vmatprep.subr.mxu0 0.0
        %722 = vmatpush1.msra.mxu0 0.0
        %723 = vmatprep.subr.mxu0 0.0
        %724 = vmatpush1.msra.mxu0 0.0
        %725 = vmatprep.subr.mxu0 0.0
        %726 = vmatpush1.msra.mxu0 0.0
        %727 = vmatprep.subr.mxu0 0.0
        %728 = vmatpush1.msra.mxu0 0.0
        %729 = vmatprep.mubr.f32.mxu0 0.0
        %730 = vmatmul.mubr.f32.gmra.mrb[0].mxu0 %v660
        %v731 = vpop.f32.mrb[0].mxu0
        %v732 = vadd.f32 0.0, %v731
        %v733 = vpop.f32.mrb[0].mxu0
        %734 = vmatprep.mubr.f32.mxu0 0.0
        %735 = vmatmul.mubr.f32.gmra.mrb[0].mxu0 %v663
        %v736 = vpop.f32.mrb[0].mxu0
        %v737 = vadd.f32 0.0, %v736
        %v738 = vpop.f32.mrb[0].mxu0
        %739 = vdwg.mxu0
        %742 = vrot.lane.b32.xlu0 %v732, 112
        %v743 = vpop.permute.xlu0 %742
        %744 = vrot.lane.b32.xlu0 %v737, 112
        %v745 = vpop.permute.xlu0 %744
        %748 = vxpose.xlu0.b32.start [1/16] %v743, 128
        %749 = vxpose.xlu0.b32.cont [2/16] %v745, 128
        %750 = vxpose.xlu0.b32.cont [3/16] 0.0, 128
        %751 = vxpose.xlu0.b32.cont [4/16] 0.0, 128
        %752 = vxpose.xlu0.b32.cont [5/16] 0.0, 128
        %753 = vxpose.xlu0.b32.cont [6/16] 0.0, 128
        %754 = vxpose.xlu0.b32.cont [7/16] 0.0, 128
        %755 = vxpose.xlu0.b32.cont [8/16] 0.0, 128
        %756 = vxpose.xlu0.b32.cont [9/16] 0.0, 128
        %757 = vxpose.xlu0.b32.cont [10/16] 0.0, 128
        %758 = vxpose.xlu0.b32.cont [11/16] 0.0, 128
        %759 = vxpose.xlu0.b32.cont [12/16] 0.0, 128
        %760 = vxpose.xlu0.b32.cont [13/16] 0.0, 128
        %761 = vxpose.xlu0.b32.cont [14/16] 0.0, 128
        %762 = vxpose.xlu0.b32.cont [15/16] 0.0, 128
        %763 = vxpose.xlu0.b32.end [16/16] 0.0, 128
        %v764 = vpop.trf.xlu0
        %v765 = vpop.trf.xlu0
        %v766 = vpop.trf.xlu0
        %v767 = vpop.trf.xlu0
        %v768 = vpop.trf.xlu0
        %v769 = vpop.trf.xlu0
        %v770 = vpop.trf.xlu0
        %v771 = vpop.trf.xlu0
        %v772 = vpop.trf.xlu0
        %v773 = vpop.trf.xlu0
        %v774 = vpop.trf.xlu0
        %v775 = vpop.trf.xlu0
        %v776 = vpop.trf.xlu0
        %v777 = vpop.trf.xlu0
        %v778 = vpop.trf.xlu0
        %v779 = vpop.trf.xlu0
        %780 = vrot.lane.b32.xlu0 %v732, 110
        %v781 = vpop.permute.xlu0 %780
        %782 = vrot.lane.b32.xlu0 %v737, 110
        %v783 = vpop.permute.xlu0 %782
        %786 = vxpose.xlu0.b32.start [1/16] %v781, 128
        %787 = vxpose.xlu0.b32.cont [2/16] %v783, 128
        %788 = vxpose.xlu0.b32.cont [3/16] 0.0, 128
        %789 = vxpose.xlu0.b32.cont [4/16] 0.0, 128
        %790 = vxpose.xlu0.b32.cont [5/16] 0.0, 128
        %791 = vxpose.xlu0.b32.cont [6/16] 0.0, 128
        %792 = vxpose.xlu0.b32.cont [7/16] 0.0, 128
        %793 = vxpose.xlu0.b32.cont [8/16] 0.0, 128
        %794 = vxpose.xlu0.b32.cont [9/16] 0.0, 128
        %795 = vxpose.xlu0.b32.cont [10/16] 0.0, 128
        %796 = vxpose.xlu0.b32.cont [11/16] 0.0, 128
        %797 = vxpose.xlu0.b32.cont [12/16] 0.0, 128
        %798 = vxpose.xlu0.b32.cont [13/16] 0.0, 128
        %799 = vxpose.xlu0.b32.cont [14/16] 0.0, 128
        %800 = vxpose.xlu0.b32.cont [15/16] 0.0, 128
        %801 = vxpose.xlu0.b32.end [16/16] 0.0, 128
        %v802 = vpop.trf.xlu0
        %v803 = vpop.trf.xlu0
        %v804 = vpop.trf.xlu0
        %v805 = vpop.trf.xlu0
        %v806 = vpop.trf.xlu0
        %v807 = vpop.trf.xlu0
        %v808 = vpop.trf.xlu0
        %v809 = vpop.trf.xlu0
        %v810 = vpop.trf.xlu0
        %v811 = vpop.trf.xlu0
        %v812 = vpop.trf.xlu0
        %v813 = vpop.trf.xlu0
        %v814 = vpop.trf.xlu0
        %v815 = vpop.trf.xlu0
        %v816 = vpop.trf.xlu0
        %v817 = vpop.trf.xlu0
        %v818 = vlaneseq
        %v819 = vshrl.u32 %v818, 7
        %v820 = vsub.s32 0, %v819
        %v821 = vrot.slane %v764, %v820
        %823 = vbcast.lane.b32.xlu0 %v821, 256
        %v824 = vpop.permute.xlu0 %823
        %s826 = sor.u32 256, 8
        %827 = vbcast.lane.b32.xlu0 %v821, %s826
        %v828 = vpop.permute.xlu0 %827
        %v829 = vlaneseq
        %v830 = vshrl.u32 %v829, 7
        %v831 = vsub.s32 1, %v830
        %v832 = vrot.slane %v764, %v831
        %834 = vbcast.lane.b32.xlu0 %v832, 256
        %v835 = vpop.permute.xlu0 %834
        %s837 = sor.u32 256, 8
        %838 = vbcast.lane.b32.xlu0 %v832, %s837
        %v839 = vpop.permute.xlu0 %838
        %v842 = vunpack.c.l.s4 1966171168
        %v843 = vunpack.c.0.s8 %v842
        %v844 = vlaneseq
        %v845 = vshrl.u32 %v844, 7
        %v846 = vsub.s32 %v843, %v845
        %v847 = vrot.slane %v802, %v846
        %v848 = vcombine.high %v847, %v847
        %v850 = vunpack.c.l.s4 1966171168
        %v851 = vunpack.c.0.s8 %v850
        %v852 = vlaneseq
        %v853 = vshrl.u32 %v852, 7
        %v854 = vsub.s32 %v851, %v853
        %v855 = vrot.slane %v847, %v854
        %v857 = vunpack.c.l.s4 1966171168
        %v858 = vunpack.c.0.s8 %v857
        %v859 = vlaneseq
        %v860 = vshrl.u32 %v859, 7
        %v861 = vsub.s32 %v858, %v860
        %v862 = vrot.slane %v848, %v861
        %v863 = vlaneseq
        %v864 = vshrl.u32 %v863, 7
        %v865 = vsub.s32 0, %v864
        %v866 = vrot.slane %v855, %v865
        %v867 = vlaneseq
        %v868 = vshrl.u32 %v867, 7
        %v869 = vsub.s32 0, %v868
        %v870 = vrot.slane %v862, %v869
        %v873 = vadd.f32 %v824, %v866
        %v874 = vadd.f32 %v828, %v866
        %v875 = vadd.f32 %v835, %v870
        %v876 = vadd.f32 %v839, %v870
        %vm877 = vcmp.gt.f32.partialorder %v873, 0.0
        %vm878 = vcmp.gt.f32.partialorder %v874, 0.0
        %vm879 = vcmp.gt.f32.partialorder %v875, 0.0
        %vm880 = vcmp.gt.f32.partialorder %v876, 0.0
        %v881 = vmul.f32 %v873, 0.2
        %v882 = vmul.f32 %v874, 0.2
        %v883 = vmul.f32 %v875, 0.2
        %v884 = vmul.f32 %v876, 0.2
        %v885 = vsel %vm877, %v873, %v881
        %v886 = vsel %vm878, %v874, %v882
        %v887 = vsel %vm879, %v875, %v883
        %v888 = vsel %vm880, %v876, %v884
        %v889 = vadd.f32 %v885, %v470
        %v890 = vadd.f32 %v886, %v471
        %v891 = vadd.f32 %v887, %v470
        %v892 = vadd.f32 %v888, %v471
        %v893 = vsel %vm475, %v889, -inf
        %894 = vmax.xlane.f32.xlu0 %v893
        %v895 = vpop.xlane.xlu0 %894
        %v896 = vsel %vm475, %v890, -inf
        %897 = vmax.xlane.f32.xlu0 %v896
        %v898 = vpop.xlane.xlu0 %897
        %v899 = vsel %vm475, %v891, -inf
        %900 = vmax.xlane.f32.xlu0 %v899
        %v901 = vpop.xlane.xlu0 %900
        %v902 = vsel %vm475, %v892, -inf
        %903 = vmax.xlane.f32.xlu0 %v902
        %v904 = vpop.xlane.xlu0 %903
        %v905 = vsub.f32 %v889, %v895
        %v906 = vsub.f32 %v890, %v898
        %v907 = vsub.f32 %v891, %v901
        %v908 = vsub.f32 %v892, %v904
        %v909 = vmul.f32 %v905, 1.442695
        %v910 = vpow.pop %v909
        %v911 = vmul.f32 %v906, 1.442695
        %v912 = vpow.pop %v911
        %v913 = vmul.f32 %v907, 1.442695
        %v914 = vpow.pop %v913
        %v915 = vmul.f32 %v908, 1.442695
        %v916 = vpow.pop %v915
        %v917 = vsel %vm475, %v910, 0.0
        %918 = vadd.xlane.f32.xlu0 %v917
        %v919 = vpop.xlane.xlu0 %918
        %v920 = vsel %vm475, %v912, 0.0
        %921 = vadd.xlane.f32.xlu0 %v920
        %v922 = vpop.xlane.xlu0 %921
        %v923 = vsel %vm475, %v914, 0.0
        %924 = vadd.xlane.f32.xlu0 %v923
        %v925 = vpop.xlane.xlu0 %924
        %v926 = vsel %vm475, %v916, 0.0
        %927 = vadd.xlane.f32.xlu0 %v926
        %v928 = vpop.xlane.xlu0 %927
        %v929 = vrcp.pop %v919
        %v930 = vrcp.pop %v922
        %v931 = vrcp.pop %v925
        %v932 = vrcp.pop %v928
        %v933 = vmul.f32 %v919, %v929
        %v934 = vmul.f32 %v922, %v930
        %v935 = vmul.f32 %v925, %v931
        %v936 = vmul.f32 %v928, %v932
        %v937 = vsub.f32 2.0, %v933
        %v938 = vsub.f32 2.0, %v934
        %v939 = vsub.f32 2.0, %v935
        %v940 = vsub.f32 2.0, %v936
        %v941 = vmul.f32 %v929, %v937
        %v942 = vmul.f32 %v930, %v938
        %v943 = vmul.f32 %v931, %v939
        %v944 = vmul.f32 %v932, %v940
        %v945 = vmul.f32 %v910, %v941
        %v946 = vmul.f32 %v912, %v942
        %v947 = vmul.f32 %v914, %v943
        %v948 = vmul.f32 %v916, %v944
        %v950 = vsel %vm475, %v945, 0
        %v953 = vsel %vm475, %v946, 0
        %955 = vmatprep.subr.mxu0 0.0
        %956 = vmatpush1.msra.mxu0 %v732
        %957 = vmatprep.subr.mxu0 0.0
        %958 = vmatpush1.msra.mxu0 %v737
        %959 = vmatprep.subr.mxu0 0.0
        %960 = vmatpush1.msra.mxu0 0.0
        %961 = vmatprep.subr.mxu0 0.0
        %962 = vmatpush1.msra.mxu0 0.0
        %963 = vmatprep.subr.mxu0 0.0
        %964 = vmatpush1.msra.mxu0 0.0
        %965 = vmatprep.subr.mxu0 0.0
        %966 = vmatpush1.msra.mxu0 0.0
        %967 = vmatprep.subr.mxu0 0.0
        %968 = vmatpush1.msra.mxu0 0.0
        %969 = vmatprep.subr.mxu0 0.0
        %970 = vmatpush1.msra.mxu0 0.0
        %971 = vmatprep.subr.mxu0 0.0
        %972 = vmatpush1.msra.mxu0 0.0
        %973 = vmatprep.subr.mxu0 0.0
        %974 = vmatpush1.msra.mxu0 0.0
        %975 = vmatprep.subr.mxu0 0.0
        %976 = vmatpush1.msra.mxu0 0.0
        %977 = vmatprep.subr.mxu0 0.0
        %978 = vmatpush1.msra.mxu0 0.0
        %979 = vmatprep.subr.mxu0 0.0
        %980 = vmatpush1.msra.mxu0 0.0
        %981 = vmatprep.subr.mxu0 0.0
        %982 = vmatpush1.msra.mxu0 0.0
        %983 = vmatprep.subr.mxu0 0.0
        %984 = vmatpush1.msra.mxu0 0.0
        %985 = vmatprep.subr.mxu0 0.0
        %986 = vmatpush1.msra.mxu0 0.0
        %987 = vmatprep.subr.mxu0 0.0
        %988 = vmatpush1.msra.mxu0 0.0
        %989 = vmatprep.subr.mxu0 0.0
        %990 = vmatpush1.msra.mxu0 0.0
        %991 = vmatprep.subr.mxu0 0.0
        %992 = vmatpush1.msra.mxu0 0.0
        %993 = vmatprep.subr.mxu0 0.0
        %994 = vmatpush1.msra.mxu0 0.0
        %995 = vmatprep.subr.mxu0 0.0
        %996 = vmatpush1.msra.mxu0 0.0
        %997 = vmatprep.subr.mxu0 0.0
        %998 = vmatpush1.msra.mxu0 0.0
        %999 = vmatprep.subr.mxu0 0.0
        %1000 = vmatpush1.msra.mxu0 0.0
        %1001 = vmatprep.subr.mxu0 0.0
        %1002 = vmatpush1.msra.mxu0 0.0
        %1003 = vmatprep.subr.mxu0 0.0
        %1004 = vmatpush1.msra.mxu0 0.0
        %1005 = vmatprep.subr.mxu0 0.0
        %1006 = vmatpush1.msra.mxu0 0.0
        %1007 = vmatprep.subr.mxu0 0.0
        %1008 = vmatpush1.msra.mxu0 0.0
        %1009 = vmatprep.subr.mxu0 0.0
        %1010 = vmatpush1.msra.mxu0 0.0
        %1011 = vmatprep.subr.mxu0 0.0
        %1012 = vmatpush1.msra.mxu0 0.0
        %1013 = vmatprep.subr.mxu0 0.0
        %1014 = vmatpush1.msra.mxu0 0.0
        %1015 = vmatprep.subr.mxu0 0.0
        %1016 = vmatpush1.msra.mxu0 0.0
        %1017 = vmatprep.subr.mxu0 0.0
        %1018 = vmatpush1.msra.mxu0 0.0
        %1019 = vmatprep.mubr.f32.mxu0 0.0
        %1020 = vmatmul.mubr.f32.gmra.mrb[0].mxu0 %v950
        %v1021 = vpop.f32.mrb[0].mxu0
        %v1022 = vadd.f32 0.0, %v1021
        %v1023 = vpop.f32.mrb[0].mxu0
        %1024 = vmatprep.mubr.f32.mxu0 0.0
        %1025 = vmatmul.mubr.f32.gmra.mrb[0].mxu0 %v953
        %v1026 = vpop.f32.mrb[0].mxu0
        %v1027 = vadd.f32 0.0, %v1026
        %v1028 = vpop.f32.mrb[0].mxu0
        %1029 = vdwg.mxu0
        %vm1030 = vcmp.gt.f32.partialorder %v1022, 0.0
        %vm1031 = vcmp.gt.f32.partialorder %v1027, 0.0
        %v1032 = vmul.f32 %v1022, 1.442695
        %v1033 = vpow.pop %v1032
        %v1034 = vmul.f32 %v1027, 1.442695
        %v1035 = vpow.pop %v1034
        %v1036 = vsub.f32 %v1033, 1.0
        %v1037 = vsub.f32 %v1035, 1.0
        %v1038 = vsel %vm1030, %v1022, %v1036
        %v1039 = vsel %vm1031, %v1027, %v1037
        %1040 = vrot.lane.b32.xlu0 %v732, 120
        %v1041 = vpop.permute.xlu0 %1040
        %1042 = vrot.lane.b32.xlu0 %v737, 120
        %v1043 = vpop.permute.xlu0 %1042
        %v1047 = vsel %vm475, %v947, 0
        %v1050 = vsel %vm475, %v948, 0
        %1052 = vmatprep.subr.mxu0 0.0
        %1053 = vmatpush1.msra.mxu0 %v1041
        %1054 = vmatprep.subr.mxu0 0.0
        %1055 = vmatpush1.msra.mxu0 %v1043
        %1056 = vmatprep.subr.mxu0 0.0
        %1057 = vmatpush1.msra.mxu0 0.0
        %1058 = vmatprep.subr.mxu0 0.0
        %1059 = vmatpush1.msra.mxu0 0.0
        %1060 = vmatprep.subr.mxu0 0.0
        %1061 = vmatpush1.msra.mxu0 0.0
        %1062 = vmatprep.subr.mxu0 0.0
        %1063 = vmatpush1.msra.mxu0 0.0
        %1064 = vmatprep.subr.mxu0 0.0
        %1065 = vmatpush1.msra.mxu0 0.0
        %1066 = vmatprep.subr.mxu0 0.0
        %1067 = vmatpush1.msra.mxu0 0.0
        %1068 = vmatprep.subr.mxu0 0.0
        %1069 = vmatpush1.msra.mxu0 0.0
        %1070 = vmatprep.subr.mxu0 0.0
        %1071 = vmatpush1.msra.mxu0 0.0
        %1072 = vmatprep.subr.mxu0 0.0
        %1073 = vmatpush1.msra.mxu0 0.0
        %1074 = vmatprep.subr.mxu0 0.0
        %1075 = vmatpush1.msra.mxu0 0.0
        %1076 = vmatprep.subr.mxu0 0.0
        %1077 = vmatpush1.msra.mxu0 0.0
        %1078 = vmatprep.subr.mxu0 0.0
        %1079 = vmatpush1.msra.mxu0 0.0
        %1080 = vmatprep.subr.mxu0 0.0
        %1081 = vmatpush1.msra.mxu0 0.0
        %1082 = vmatprep.subr.mxu0 0.0
        %1083 = vmatpush1.msra.mxu0 0.0
        %1084 = vmatprep.subr.mxu0 0.0
        %1085 = vmatpush1.msra.mxu0 0.0
        %1086 = vmatprep.subr.mxu0 0.0
        %1087 = vmatpush1.msra.mxu0 0.0
        %1088 = vmatprep.subr.mxu0 0.0
        %1089 = vmatpush1.msra.mxu0 0.0
        %1090 = vmatprep.subr.mxu0 0.0
        %1091 = vmatpush1.msra.mxu0 0.0
        %1092 = vmatprep.subr.mxu0 0.0
        %1093 = vmatpush1.msra.mxu0 0.0
        %1094 = vmatprep.subr.mxu0 0.0
        %1095 = vmatpush1.msra.mxu0 0.0
        %1096 = vmatprep.subr.mxu0 0.0
        %1097 = vmatpush1.msra.mxu0 0.0
        %1098 = vmatprep.subr.mxu0 0.0
        %1099 = vmatpush1.msra.mxu0 0.0
        %1100 = vmatprep.subr.mxu0 0.0
        %1101 = vmatpush1.msra.mxu0 0.0
        %1102 = vmatprep.subr.mxu0 0.0
        %1103 = vmatpush1.msra.mxu0 0.0
        %1104 = vmatprep.subr.mxu0 0.0
        %1105 = vmatpush1.msra.mxu0 0.0
        %1106 = vmatprep.subr.mxu0 0.0
        %1107 = vmatpush1.msra.mxu0 0.0
        %1108 = vmatprep.subr.mxu0 0.0
        %1109 = vmatpush1.msra.mxu0 0.0
        %1110 = vmatprep.subr.mxu0 0.0
        %1111 = vmatpush1.msra.mxu0 0.0
        %1112 = vmatprep.subr.mxu0 0.0
        %1113 = vmatpush1.msra.mxu0 0.0
        %1114 = vmatprep.subr.mxu0 0.0
        %1115 = vmatpush1.msra.mxu0 0.0
        %1116 = vmatprep.mubr.f32.mxu0 0.0
        %1117 = vmatmul.mubr.f32.gmra.mrb[0].mxu0 %v1047
        %v1118 = vpop.f32.mrb[0].mxu0
        %v1119 = vadd.f32 0.0, %v1118
        %v1120 = vpop.f32.mrb[0].mxu0
        %1121 = vmatprep.mubr.f32.mxu0 0.0
        %1122 = vmatmul.mubr.f32.gmra.mrb[0].mxu0 %v1050
        %v1123 = vpop.f32.mrb[0].mxu0
        %v1124 = vadd.f32 0.0, %v1123
        %v1125 = vpop.f32.mrb[0].mxu0
        %1126 = vdwg.mxu0
        %vm1127 = vcmp.gt.f32.partialorder %v1119, 0.0
        %vm1128 = vcmp.gt.f32.partialorder %v1124, 0.0
        %v1129 = vmul.f32 %v1119, 1.442695
        %v1130 = vpow.pop %v1129
        %v1131 = vmul.f32 %v1124, 1.442695
        %v1132 = vpow.pop %v1131
        %v1133 = vsub.f32 %v1130, 1.0
        %v1134 = vsub.f32 %v1132, 1.0
        %v1135 = vsel %vm1127, %v1119, %v1133
        %v1136 = vsel %vm1128, %v1124, %v1134
        %1139 = vrot.lane.b32.xlu0 %v1135, 8
        %v1140 = vpop.permute.xlu0 %1139
        %1141 = vrot.lane.b32.xlu0 %v1136, 8
        %v1142 = vpop.permute.xlu0 %1141
        %vm1145 = vcmask 64512
        %v1146 = vsel %vm1145, %v1038, %v1140
        %v1147 = vsel %vm1145, %v1039, %v1142
        %v1148 = vld [vmem:[%s4] sm:$0xff]
        %v1149 = vld [vmem:[%s4 + $0x8] sm:$0xff]
        %v1150 = vld [vmem:[%s5] sm:$0xf]
        %v1151 = vsel %vm475, %v1146, 0.0
        %v1152 = vsel %vm475, %v1147, 0.0
        %v1153 = vadd.f32 %v1151, %v1152
        %v1154 = vrot.slane %v1153, 4
        %v1155 = vadd.f32 %v1153, %v1154
        %v1156 = vrot.slane %v1155, 2
        %v1157 = vadd.f32 %v1155, %v1156
        %v1158 = vrot.slane %v1157, 1
        %v1159 = vadd.f32 %v1157, %v1158
        %v1160 = vmul.f32 %v1159, %v485
        %1163 = vrot.lane.b32.xlu0 %v1148, 118
        %v1164 = vpop.permute.xlu0 %1163
        %1165 = vrot.lane.b32.xlu0 %v1149, 118
        %v1166 = vpop.permute.xlu0 %1165
        %v1170 = vsel %vm475, %v1160, 0
        %1172 = vmatprep.subr.mxu0 0.0
        %1173 = vmatpush1.msra.mxu0 %v1164
        %1174 = vmatprep.subr.mxu0 0.0
        %1175 = vmatpush1.msra.mxu0 %v1166
        %1176 = vmatprep.subr.mxu0 0.0
        %1177 = vmatpush1.msra.mxu0 0.0
        %1178 = vmatprep.subr.mxu0 0.0
        %1179 = vmatpush1.msra.mxu0 0.0
        %1180 = vmatprep.subr.mxu0 0.0
        %1181 = vmatpush1.msra.mxu0 0.0
        %1182 = vmatprep.subr.mxu0 0.0
        %1183 = vmatpush1.msra.mxu0 0.0
        %1184 = vmatprep.subr.mxu0 0.0
        %1185 = vmatpush1.msra.mxu0 0.0
        %1186 = vmatprep.subr.mxu0 0.0
        %1187 = vmatpush1.msra.mxu0 0.0
        %1188 = vmatprep.subr.mxu0 0.0
        %1189 = vmatpush1.msra.mxu0 0.0
        %1190 = vmatprep.subr.mxu0 0.0
        %1191 = vmatpush1.msra.mxu0 0.0
        %1192 = vmatprep.subr.mxu0 0.0
        %1193 = vmatpush1.msra.mxu0 0.0
        %1194 = vmatprep.subr.mxu0 0.0
        %1195 = vmatpush1.msra.mxu0 0.0
        %1196 = vmatprep.subr.mxu0 0.0
        %1197 = vmatpush1.msra.mxu0 0.0
        %1198 = vmatprep.subr.mxu0 0.0
        %1199 = vmatpush1.msra.mxu0 0.0
        %1200 = vmatprep.subr.mxu0 0.0
        %1201 = vmatpush1.msra.mxu0 0.0
        %1202 = vmatprep.subr.mxu0 0.0
        %1203 = vmatpush1.msra.mxu0 0.0
        %1204 = vmatprep.subr.mxu0 0.0
        %1205 = vmatpush1.msra.mxu0 0.0
        %1206 = vmatprep.subr.mxu0 0.0
        %1207 = vmatpush1.msra.mxu0 0.0
        %1208 = vmatprep.subr.mxu0 0.0
        %1209 = vmatpush1.msra.mxu0 0.0
        %1210 = vmatprep.subr.mxu0 0.0
        %1211 = vmatpush1.msra.mxu0 0.0
        %1212 = vmatprep.subr.mxu0 0.0
        %1213 = vmatpush1.msra.mxu0 0.0
        %1214 = vmatprep.subr.mxu0 0.0
        %1215 = vmatpush1.msra.mxu0 0.0
        %1216 = vmatprep.subr.mxu0 0.0
        %1217 = vmatpush1.msra.mxu0 0.0
        %1218 = vmatprep.subr.mxu0 0.0
        %1219 = vmatpush1.msra.mxu0 0.0
        %1220 = vmatprep.subr.mxu0 0.0
        %1221 = vmatpush1.msra.mxu0 0.0
        %1222 = vmatprep.subr.mxu0 0.0
        %1223 = vmatpush1.msra.mxu0 0.0
        %1224 = vmatprep.subr.mxu0 0.0
        %1225 = vmatpush1.msra.mxu0 0.0
        %1226 = vmatprep.subr.mxu0 0.0
        %1227 = vmatpush1.msra.mxu0 0.0
        %1228 = vmatprep.subr.mxu0 0.0
        %1229 = vmatpush1.msra.mxu0 0.0
        %1230 = vmatprep.subr.mxu0 0.0
        %1231 = vmatpush1.msra.mxu0 0.0
        %1232 = vmatprep.subr.mxu0 0.0
        %1233 = vmatpush1.msra.mxu0 0.0
        %1234 = vmatprep.subr.mxu0 0.0
        %1235 = vmatpush1.msra.mxu0 0.0
        %1236 = vmatprep.mubr.f32.mxu0 0.0
        %1237 = vmatmul.mubr.f32.gmra.mrb[0].mxu0 %v1170
        %v1238 = vpop.f32.mrb[0].mxu0
        %v1239 = vadd.f32 0.0, %v1238
        %v1240 = vpop.f32.mrb[0].mxu0
        %1241 = vdwg.mxu0
        %v1242 = vmax.f32 %v1239, 0.0
        %v1244 = vsel %vm569, %v1242, 0
        %v1247 = vsel %vm573, %v1150, 0
        %1249 = vmatprep.subr.mxu0 0.0
        %1250 = vmatpush1.msra.mxu0 %v1247
        %1251 = vmatprep.subr.mxu0 0.0
        %1252 = vmatpush1.msra.mxu0 0.0
        %1253 = vmatprep.subr.mxu0 0.0
        %1254 = vmatpush1.msra.mxu0 0.0
        %1255 = vmatprep.subr.mxu0 0.0
        %1256 = vmatpush1.msra.mxu0 0.0
        %1257 = vmatprep.subr.mxu0 0.0
        %1258 = vmatpush1.msra.mxu0 0.0
        %1259 = vmatprep.subr.mxu0 0.0
        %1260 = vmatpush1.msra.mxu0 0.0
        %1261 = vmatprep.subr.mxu0 0.0
        %1262 = vmatpush1.msra.mxu0 0.0
        %1263 = vmatprep.subr.mxu0 0.0
        %1264 = vmatpush1.msra.mxu0 0.0
        %1265 = vmatprep.subr.mxu0 0.0
        %1266 = vmatpush1.msra.mxu0 0.0
        %1267 = vmatprep.subr.mxu0 0.0
        %1268 = vmatpush1.msra.mxu0 0.0
        %1269 = vmatprep.subr.mxu0 0.0
        %1270 = vmatpush1.msra.mxu0 0.0
        %1271 = vmatprep.subr.mxu0 0.0
        %1272 = vmatpush1.msra.mxu0 0.0
        %1273 = vmatprep.subr.mxu0 0.0
        %1274 = vmatpush1.msra.mxu0 0.0
        %1275 = vmatprep.subr.mxu0 0.0
        %1276 = vmatpush1.msra.mxu0 0.0
        %1277 = vmatprep.subr.mxu0 0.0
        %1278 = vmatpush1.msra.mxu0 0.0
        %1279 = vmatprep.subr.mxu0 0.0
        %1280 = vmatpush1.msra.mxu0 0.0
        %1281 = vmatprep.subr.mxu0 0.0
        %1282 = vmatpush1.msra.mxu0 0.0
        %1283 = vmatprep.subr.mxu0 0.0
        %1284 = vmatpush1.msra.mxu0 0.0
        %1285 = vmatprep.subr.mxu0 0.0
        %1286 = vmatpush1.msra.mxu0 0.0
        %1287 = vmatprep.subr.mxu0 0.0
        %1288 = vmatpush1.msra.mxu0 0.0
        %1289 = vmatprep.subr.mxu0 0.0
        %1290 = vmatpush1.msra.mxu0 0.0
        %1291 = vmatprep.subr.mxu0 0.0
        %1292 = vmatpush1.msra.mxu0 0.0
        %1293 = vmatprep.subr.mxu0 0.0
        %1294 = vmatpush1.msra.mxu0 0.0
        %1295 = vmatprep.subr.mxu0 0.0
        %1296 = vmatpush1.msra.mxu0 0.0
        %1297 = vmatprep.subr.mxu0 0.0
        %1298 = vmatpush1.msra.mxu0 0.0
        %1299 = vmatprep.subr.mxu0 0.0
        %1300 = vmatpush1.msra.mxu0 0.0
        %1301 = vmatprep.subr.mxu0 0.0
        %1302 = vmatpush1.msra.mxu0 0.0
        %1303 = vmatprep.subr.mxu0 0.0
        %1304 = vmatpush1.msra.mxu0 0.0
        %1305 = vmatprep.subr.mxu0 0.0
        %1306 = vmatpush1.msra.mxu0 0.0
        %1307 = vmatprep.subr.mxu0 0.0
        %1308 = vmatpush1.msra.mxu0 0.0
        %1309 = vmatprep.subr.mxu0 0.0
        %1310 = vmatpush1.msra.mxu0 0.0
        %1311 = vmatprep.subr.mxu0 0.0
        %1312 = vmatpush1.msra.mxu0 0.0
        %1313 = vmatprep.mubr.f32.mxu0 0.0
        %1314 = vmatmul.mubr.f32.gmra.mrb[0].mxu0 %v1244
        %v1315 = vpop.f32.mrb[0].mxu0
        %v1316 = vadd.f32 0.0, %v1315
        %v1317 = vpop.f32.mrb[0].mxu0
        %1318 = vdwg.mxu0
        %v1319 = vxor.u32 %v1316, 2147483648
        %v1320 = vmul.f32 %v1319, 1.442695
        %v1321 = vpow.pop %v1320
        %v1322 = vadd.f32 %v1321, 1.0
        %v1323 = vrcp.pop %v1322
        %v1324 = vmul.f32 1.0, %v1323
        %v1325 = vlaneseq
        %v1326 = vshrl.u32 %v1325, 7
        %v1327 = vsub.s32 0, %v1326
        %v1328 = vrot.slane %v1324, %v1327
        %v1329 = vmul.f32 %v1146, %v1328
        %v1330 = vmul.f32 %v1147, %v1328
        %v1332 = vsel %vm475, %v1329, 0
        %v1335 = vsel %vm475, %v1330, 0
        %1337 = vmatprep.subr.mxu0 0.0
        %1338 = vmatpush1.msra.mxu0 %v1148
        %1339 = vmatprep.subr.mxu0 0.0
        %1340 = vmatpush1.msra.mxu0 %v1149
        %1341 = vmatprep.subr.mxu0 0.0
        %1342 = vmatpush1.msra.mxu0 0.0
        %1343 = vmatprep.subr.mxu0 0.0
        %1344 = vmatpush1.msra.mxu0 0.0
        %1345 = vmatprep.subr.mxu0 0.0
        %1346 = vmatpush1.msra.mxu0 0.0
        %1347 = vmatprep.subr.mxu0 0.0
        %1348 = vmatpush1.msra.mxu0 0.0
        %1349 = vmatprep.subr.mxu0 0.0
        %1350 = vmatpush1.msra.mxu0 0.0
        %1351 = vmatprep.subr.mxu0 0.0
        %1352 = vmatpush1.msra.mxu0 0.0
        %1353 = vmatprep.subr.mxu0 0.0
        %1354 = vmatpush1.msra.mxu0 0.0
        %1355 = vmatprep.subr.mxu0 0.0
        %1356 = vmatpush1.msra.mxu0 0.0
        %1357 = vmatprep.subr.mxu0 0.0
        %1358 = vmatpush1.msra.mxu0 0.0
        %1359 = vmatprep.subr.mxu0 0.0
        %1360 = vmatpush1.msra.mxu0 0.0
        %1361 = vmatprep.subr.mxu0 0.0
        %1362 = vmatpush1.msra.mxu0 0.0
        %1363 = vmatprep.subr.mxu0 0.0
        %1364 = vmatpush1.msra.mxu0 0.0
        %1365 = vmatprep.subr.mxu0 0.0
        %1366 = vmatpush1.msra.mxu0 0.0
        %1367 = vmatprep.subr.mxu0 0.0
        %1368 = vmatpush1.msra.mxu0 0.0
        %1369 = vmatprep.subr.mxu0 0.0
        %1370 = vmatpush1.msra.mxu0 0.0
        %1371 = vmatprep.subr.mxu0 0.0
        %1372 = vmatpush1.msra.mxu0 0.0
        %1373 = vmatprep.subr.mxu0 0.0
        %1374 = vmatpush1.msra.mxu0 0.0
        %1375 = vmatprep.subr.mxu0 0.0
        %1376 = vmatpush1.msra.mxu0 0.0
        %1377 = vmatprep.subr.mxu0 0.0
        %1378 = vmatpush1.msra.mxu0 0.0
        %1379 = vmatprep.subr.mxu0 0.0
        %1380 = vmatpush1.msra.mxu0 0.0
        %1381 = vmatprep.subr.mxu0 0.0
        %1382 = vmatpush1.msra.mxu0 0.0
        %1383 = vmatprep.subr.mxu0 0.0
        %1384 = vmatpush1.msra.mxu0 0.0
        %1385 = vmatprep.subr.mxu0 0.0
        %1386 = vmatpush1.msra.mxu0 0.0
        %1387 = vmatprep.subr.mxu0 0.0
        %1388 = vmatpush1.msra.mxu0 0.0
        %1389 = vmatprep.subr.mxu0 0.0
        %1390 = vmatpush1.msra.mxu0 0.0
        %1391 = vmatprep.subr.mxu0 0.0
        %1392 = vmatpush1.msra.mxu0 0.0
        %1393 = vmatprep.subr.mxu0 0.0
        %1394 = vmatpush1.msra.mxu0 0.0
        %1395 = vmatprep.subr.mxu0 0.0
        %1396 = vmatpush1.msra.mxu0 0.0
        %1397 = vmatprep.subr.mxu0 0.0
        %1398 = vmatpush1.msra.mxu0 0.0
        %1399 = vmatprep.subr.mxu0 0.0
        %1400 = vmatpush1.msra.mxu0 0.0
        %1401 = vmatprep.mubr.f32.mxu0 0.0
        %1402 = vmatmul.mubr.f32.gmra.mrb[0].mxu0 %v1332
        %v1403 = vpop.f32.mrb[0].mxu0
        %v1404 = vadd.f32 0.0, %v1403
        %v1405 = vpop.f32.mrb[0].mxu0
        %1406 = vmatprep.mubr.f32.mxu0 0.0
        %1407 = vmatmul.mubr.f32.gmra.mrb[0].mxu0 %v1335
        %v1408 = vpop.f32.mrb[0].mxu0
        %v1409 = vadd.f32 0.0, %v1408
        %v1410 = vpop.f32.mrb[0].mxu0
        %1411 = vdwg.mxu0
        %1414 = vrot.lane.b32.xlu0 %v1404, 119
        %v1415 = vpop.permute.xlu0 %1414
        %1416 = vrot.lane.b32.xlu0 %v1409, 119
        %v1417 = vpop.permute.xlu0 %1416
        %1420 = vxpose.xlu0.b32.start [1/16] %v1415, 128
        %1421 = vxpose.xlu0.b32.cont [2/16] %v1417, 128
        %1422 = vxpose.xlu0.b32.cont [3/16] 0.0, 128
        %1423 = vxpose.xlu0.b32.cont [4/16] 0.0, 128
        %1424 = vxpose.xlu0.b32.cont [5/16] 0.0, 128
        %1425 = vxpose.xlu0.b32.cont [6/16] 0.0, 128
        %1426 = vxpose.xlu0.b32.cont [7/16] 0.0, 128
        %1427 = vxpose.xlu0.b32.cont [8/16] 0.0, 128
        %1428 = vxpose.xlu0.b32.cont [9/16] 0.0, 128
        %1429 = vxpose.xlu0.b32.cont [10/16] 0.0, 128
        %1430 = vxpose.xlu0.b32.cont [11/16] 0.0, 128
        %1431 = vxpose.xlu0.b32.cont [12/16] 0.0, 128
        %1432 = vxpose.xlu0.b32.cont [13/16] 0.0, 128
        %1433 = vxpose.xlu0.b32.cont [14/16] 0.0, 128
        %1434 = vxpose.xlu0.b32.cont [15/16] 0.0, 128
        %1435 = vxpose.xlu0.b32.end [16/16] 0.0, 128
        %v1436 = vpop.trf.xlu0
        %v1437 = vpop.trf.xlu0
        %v1438 = vpop.trf.xlu0
        %v1439 = vpop.trf.xlu0
        %v1440 = vpop.trf.xlu0
        %v1441 = vpop.trf.xlu0
        %v1442 = vpop.trf.xlu0
        %v1443 = vpop.trf.xlu0
        %v1444 = vpop.trf.xlu0
        %v1445 = vpop.trf.xlu0
        %v1446 = vpop.trf.xlu0
        %v1447 = vpop.trf.xlu0
        %v1448 = vpop.trf.xlu0
        %v1449 = vpop.trf.xlu0
        %v1450 = vpop.trf.xlu0
        %v1451 = vpop.trf.xlu0
        %1452 = vset.pattern.permute.xlu0 8
        %1453 = vperm.xlu0 %1452, %v1404
        %v1454 = vpop.permute.xlu0 %1453
        %1456 = vset.pattern.permute.xlu0 8
        %1457 = vperm.xlu0 %1456, %v1409
        %v1458 = vpop.permute.xlu0 %1457
        %v1460 = vlaneseq
        %v1461 = vshrl.u32 %v1460, 7
        %v1462 = vsub.s32 0, %v1461
        %v1463 = vrot.slane %v1436, %v1462
        %v1464 = vadd.f32 %v1454, %v1463
        %v1465 = vadd.f32 %v1458, %v1463
        %vm1466 = vcmp.gt.f32.partialorder %v1464, 0.0
        %vm1467 = vcmp.gt.f32.partialorder %v1465, 0.0
        %v1468 = vmul.f32 %v1464, 0.2
        %v1469 = vmul.f32 %v1465, 0.2
        %v1470 = vsel %vm1466, %v1464, %v1468
        %v1471 = vsel %vm1467, %v1465, %v1469
        %v1472 = vadd.f32 %v1470, %v470
        %v1473 = vadd.f32 %v1471, %v471
        %v1474 = vsel %vm475, %v1472, -inf
        %1475 = vmax.xlane.f32.xlu0 %v1474
        %v1476 = vpop.xlane.xlu0 %1475
        %v1477 = vsel %vm475, %v1473, -inf
        %1478 = vmax.xlane.f32.xlu0 %v1477
        %v1479 = vpop.xlane.xlu0 %1478
        %v1480 = vsub.f32 %v1472, %v1476
        %v1481 = vsub.f32 %v1473, %v1479
        %v1482 = vmul.f32 %v1480, 1.442695
        %v1483 = vpow.pop %v1482
        %v1484 = vmul.f32 %v1481, 1.442695
        %v1485 = vpow.pop %v1484
        %v1486 = vsel %vm475, %v1483, 0.0
        %1487 = vadd.xlane.f32.xlu0 %v1486
        %v1488 = vpop.xlane.xlu0 %1487
        %v1489 = vsel %vm475, %v1485, 0.0
        %1490 = vadd.xlane.f32.xlu0 %v1489
        %v1491 = vpop.xlane.xlu0 %1490
        %v1492 = vrcp.pop %v1488
        %v1493 = vrcp.pop %v1491
        %v1494 = vmul.f32 %v1488, %v1492
        %v1495 = vmul.f32 %v1491, %v1493
        %v1496 = vsub.f32 2.0, %v1494
        %v1497 = vsub.f32 2.0, %v1495
        %v1498 = vmul.f32 %v1492, %v1496
        %v1499 = vmul.f32 %v1493, %v1497
        %v1500 = vmul.f32 %v1483, %v1498
        %v1501 = vmul.f32 %v1485, %v1499
        %v1503 = vsel %vm475, %v1500, 0
        %v1506 = vsel %vm475, %v1501, 0
        %1508 = vmatprep.subr.mxu0 0.0
        %1509 = vmatpush1.msra.mxu0 %v1404
        %1510 = vmatprep.subr.mxu0 0.0
        %1511 = vmatpush1.msra.mxu0 %v1409
        %1512 = vmatprep.subr.mxu0 0.0
        %1513 = vmatpush1.msra.mxu0 0.0
        %1514 = vmatprep.subr.mxu0 0.0
        %1515 = vmatpush1.msra.mxu0 0.0
        %1516 = vmatprep.subr.mxu0 0.0
        %1517 = vmatpush1.msra.mxu0 0.0
        %1518 = vmatprep.subr.mxu0 0.0
        %1519 = vmatpush1.msra.mxu0 0.0
        %1520 = vmatprep.subr.mxu0 0.0
        %1521 = vmatpush1.msra.mxu0 0.0
        %1522 = vmatprep.subr.mxu0 0.0
        %1523 = vmatpush1.msra.mxu0 0.0
        %1524 = vmatprep.subr.mxu0 0.0
        %1525 = vmatpush1.msra.mxu0 0.0
        %1526 = vmatprep.subr.mxu0 0.0
        %1527 = vmatpush1.msra.mxu0 0.0
        %1528 = vmatprep.subr.mxu0 0.0
        %1529 = vmatpush1.msra.mxu0 0.0
        %1530 = vmatprep.subr.mxu0 0.0
        %1531 = vmatpush1.msra.mxu0 0.0
        %1532 = vmatprep.subr.mxu0 0.0
        %1533 = vmatpush1.msra.mxu0 0.0
        %1534 = vmatprep.subr.mxu0 0.0
        %1535 = vmatpush1.msra.mxu0 0.0
        %1536 = vmatprep.subr.mxu0 0.0
        %1537 = vmatpush1.msra.mxu0 0.0
        %1538 = vmatprep.subr.mxu0 0.0
        %1539 = vmatpush1.msra.mxu0 0.0
        %1540 = vmatprep.subr.mxu0 0.0
        %1541 = vmatpush1.msra.mxu0 0.0
        %1542 = vmatprep.subr.mxu0 0.0
        %1543 = vmatpush1.msra.mxu0 0.0
        %1544 = vmatprep.subr.mxu0 0.0
        %1545 = vmatpush1.msra.mxu0 0.0
        %1546 = vmatprep.subr.mxu0 0.0
        %1547 = vmatpush1.msra.mxu0 0.0
        %1548 = vmatprep.subr.mxu0 0.0
        %1549 = vmatpush1.msra.mxu0 0.0
        %1550 = vmatprep.subr.mxu0 0.0
        %1551 = vmatpush1.msra.mxu0 0.0
        %1552 = vmatprep.subr.mxu0 0.0
        %1553 = vmatpush1.msra.mxu0 0.0
        %1554 = vmatprep.subr.mxu0 0.0
        %1555 = vmatpush1.msra.mxu0 0.0
        %1556 = vmatprep.subr.mxu0 0.0
        %1557 = vmatpush1.msra.mxu0 0.0
        %1558 = vmatprep.subr.mxu0 0.0
        %1559 = vmatpush1.msra.mxu0 0.0
        %1560 = vmatprep.subr.mxu0 0.0
        %1561 = vmatpush1.msra.mxu0 0.0
        %1562 = vmatprep.subr.mxu0 0.0
        %1563 = vmatpush1.msra.mxu0 0.0
        %1564 = vmatprep.subr.mxu0 0.0
        %1565 = vmatpush1.msra.mxu0 0.0
        %1566 = vmatprep.subr.mxu0 0.0
        %1567 = vmatpush1.msra.mxu0 0.0
        %1568 = vmatprep.subr.mxu0 0.0
        %1569 = vmatpush1.msra.mxu0 0.0
        %1570 = vmatprep.subr.mxu0 0.0
        %1571 = vmatpush1.msra.mxu0 0.0
        %1572 = vmatprep.mubr.f32.mxu0 0.0
        %1573 = vmatmul.mubr.f32.gmra.mrb[0].mxu0 %v1503
        %v1574 = vpop.f32.mrb[0].mxu0
        %v1575 = vadd.f32 0.0, %v1574
        %v1576 = vpop.f32.mrb[0].mxu0
        %1577 = vmatprep.mubr.f32.mxu0 0.0
        %1578 = vmatmul.mubr.f32.gmra.mrb[0].mxu0 %v1506
        %v1579 = vpop.f32.mrb[0].mxu0
        %v1580 = vadd.f32 0.0, %v1579
        %v1581 = vpop.f32.mrb[0].mxu0
        %1582 = vdwg.mxu0
        %vm1583 = vcmp.gt.f32.partialorder %v1575, 0.0
        %vm1584 = vcmp.gt.f32.partialorder %v1580, 0.0
        %v1585 = vmul.f32 %v1575, 1.442695
        %v1586 = vpow.pop %v1585
        %v1587 = vmul.f32 %v1580, 1.442695
        %v1588 = vpow.pop %v1587
        %v1589 = vsub.f32 %v1586, 1.0
        %v1590 = vsub.f32 %v1588, 1.0
        %v1591 = vsel %vm1583, %v1575, %v1589
        %v1592 = vsel %vm1584, %v1580, %v1590
        %1593 = vst.msk [vmem:[%s299] sm:$0xff] %vm1145, %v1591
        %1594 = vst.msk [vmem:[%s299 + $0x8] sm:$0xff] %vm1145, %v1592
        %p1595 = scmp.lt.s32.totalorder %s19, 1
        %s1596 = scalar_select %p1595, %s19, 1
        %s1597 = smul.addr %s1596, 2
        %s1598 = smul.addr %s1597, 8
        %s1599 = scalar_lea.vmem %s6, %s1598
        // Predicated region
        $region53: #{tpu_custom_call.1} parent=43 // pred_check
          %p1600 = pneg %p173
        $region54: #{tpu_custom_call.1} parent=43 // pred_check_branch
          %1602 = sbr.rel (%p1600) target = $region56
        $region55: #{tpu_custom_call.1} parent=43 // pred_region
          _
        $region56: #{tpu_custom_call.1} parent=43 // pred_fallthru
          _
      $region44: #{tpu_custom_call.1} parent=5 // pred_fallthru
        _
      %p1603 = scmp.le.s32.totalorder 2, %s14
      // Predicated region
      $region57: #{tpu_custom_call.1} parent=5 // pred_check
        %p1604 = pneg %p1603
      $region58: #{tpu_custom_call.1} parent=5 // pred_check_branch
        %1606 = sbr.rel (%p1604) target = $region60
      $region59: #{tpu_custom_call.1} parent=5 // pred_region
        %s1607 = ssub.s32 %s14, 2
        // Predicated region
        $region61: #{tpu_custom_call.1} parent=59 // pred_check
          %p1608 = pneg %p179
        $region62: #{tpu_custom_call.1} parent=59 // pred_check_branch
          %1610 = sbr.rel (%p1608) target = $region64
        $region63: #{tpu_custom_call.1} parent=59 // pred_region
          %p1611 = scmp.lt.s32.totalorder %s20, 1
          %s1612 = scalar_select %p1611, %s20, 1
          %s1613 = smul.addr %s1612, 2
          %s1614 = smul.addr %s1613, 8
          %s1615 = scalar_lea.vmem %s6, %s1614
        $region64: #{tpu_custom_call.1} parent=59 // pred_fallthru
          _
      $region60: #{tpu_custom_call.1} parent=5 // pred_fallthru
        _
    $region6: #{tpu_custom_call.1} parent=1 // loop_footer
      %s18 = sadd.s32 1, %s14
    $region7: #{tpu_custom_call.1} parent=1 // loop_footer_branch
      %13 = sbr.rel target = $region3
    $region8: #{tpu_custom_call.1} parent=1 // loop_exit
      _
    %1616 = vsyncpa [#allocation3], 1
    %s1617 = scalar_lea.sflag [#allocation3], 1
    %1618 = vsyncpa %s1617, 1
    %1619 = vsyncpa [#allocation5], 1

</llo_original>
